<compile_context>
chip_gen: v5e
topology: v5e:2x2
jax: 0.10.0
libtpu: 0.0.40
codegen_flags: <defaults>
</compile_context>

<pallas_src>
import functools

import jax
import jax.numpy as jnp
from jax.experimental import pallas as pl
from jax.experimental.pallas import tpu as pltpu


# ------------------------------ Pallas kernels ------------------------------

def _conv1_pool_kernel(p_ref, w_ref, b_ref, o_ref):
    """relu(max_win(W @ P[win]) + b)  == pool(relu(conv1 + b)).

    p_ref: (4, 75, TM) bf16  pool-fused im2col patches (lane-dense M tile)
    w_ref: (8, 75)     bf16  conv1 weight, OC padded 6 -> 8 with zero rows
    b_ref: (8, 1)      f32
    o_ref: (8, TM)     f32   pooled activations, columns ordered (b, oh, ow)
    """
    w = w_ref[...]
    y0 = jnp.dot(w, p_ref[0], preferred_element_type=jnp.float32)
    y1 = jnp.dot(w, p_ref[1], preferred_element_type=jnp.float32)
    y2 = jnp.dot(w, p_ref[2], preferred_element_type=jnp.float32)
    y3 = jnp.dot(w, p_ref[3], preferred_element_type=jnp.float32)
    y = jnp.maximum(jnp.maximum(y0, y1), jnp.maximum(y2, y3))
    o_ref[...] = jnp.maximum(y + b_ref[...], 0.0)


def _conv2_pool_fc_kernel(p_ref, w2_ref, b2_ref, fc1w_ref, fc1b_ref,
                          fc2w_ref, fc2b_ref, fc3w_ref, fc3b_ref,
                          o_ref, flat_ref, *, bt):
    """conv2 + bias + ReLU + 2x2 max-pool + fc1 + fc2 + fc3, all in VMEM.

    p_ref:    (1, 100*bt, 150) bf16, rows ordered (win, hw, b)
    w2_ref:   (150, 16) bf16         b2_ref: (1, 16) f32
    fc1w_ref: (400, 120) f32, rows ordered hw-major (hw*16 + c)
    fc1b_ref: (1, 120)   fc2w_ref: (120, 84)  fc2b_ref: (1, 84)
    fc3w_ref: (84, 10)   fc3b_ref: (1, 10)
    o_ref:    (bt, 10)
    flat_ref: (bt, 400) f32 VMEM scratch (PyTorch-flattened pooled act.)
    """
    n = 25 * bt
    # One merged MXU call for all 4 pooling windows x 25 spatial positions.
    y = jnp.dot(p_ref[0], w2_ref[...], preferred_element_type=jnp.float32)
    y = jnp.maximum(jnp.maximum(y[0:n], y[n:2 * n]),
                    jnp.maximum(y[2 * n:3 * n], y[3 * n:4 * n]))
    y = jnp.maximum(y + b2_ref[...], 0.0)          # (25*bt, 16), rows (hw, b)

    # Scatter per-position channel slabs into the flatten layout (hw-major
    # lanes; fc1 weight was re-ordered to match at trace time).
    for hw in range(25):
        flat_ref[:, hw * 16:(hw + 1) * 16] = y[hw * bt:(hw + 1) * bt, :]

    # fc1 as a single (bt, 400) @ (400, 120) matmul.
    h = jnp.dot(flat_ref[...], fc1w_ref[...], preferred_element_type=jnp.float32)
    h = jnp.maximum(h + fc1b_ref[...], 0.0)
    h = jnp.dot(h, fc2w_ref[...], preferred_element_type=jnp.float32)
    h = jnp.maximum(h + fc2b_ref[...], 0.0)
    o_ref[...] = (jnp.dot(h, fc3w_ref[...], preferred_element_type=jnp.float32)
                  + fc3b_ref[...])


# ------------------------------ glue (XLA side) ------------------------------

def _pool_patches_T(x, kh, kw):
    """Pool-fused im2col, transposed: (4, C*kh*kw, B*PH*PW).

    [win=(i,j), (c,dy,dx), (b,oh,ow)] = x[b, c, 2*oh + i + dy, 2*ow + j + dx]
    """
    B, C, H, W = x.shape
    OH, OW = H - kh + 1, W - kw + 1
    PH, PW = OH // 2, OW // 2
    p = jnp.stack([x[:, :, dy:dy + OH, dx:dx + OW]
                   for dy in range(kh) for dx in range(kw)], axis=-1)
    p = p[:, :, :2 * PH, :2 * PW, :].reshape(B, C, PH, 2, PW, 2, kh * kw)
    p = p.transpose(3, 5, 1, 6, 0, 2, 4)          # (2, 2, C, K, B, PH, PW)
    return p.reshape(4, C * kh * kw, B * PH * PW)


def _pool_patches4(x, kh, kw):
    """Pool-fused im2col: (4, PH*PW, B, C*kh*kw), middle axes = (hw, b)."""
    B, C, H, W = x.shape
    OH, OW = H - kh + 1, W - kw + 1
    PH, PW = OH // 2, OW // 2
    p = jnp.stack([x[:, :, dy:dy + OH, dx:dx + OW]
                   for dy in range(kh) for dx in range(kw)], axis=-1)
    p = p[:, :, :2 * PH, :2 * PW, :].reshape(B, C, PH, 2, PW, 2, kh * kw)
    p = p.transpose(3, 5, 2, 4, 0, 1, 6)          # (2, 2, PH, PW, B, C, K)
    return p.reshape(4, PH * PW, B, C * kh * kw)


# ----------------------------- parameters / model ----------------------------

def init_params(key):
    def uni(k, shape, fan_in):
        bound = 1.0 / float(fan_in) ** 0.5
        return jax.random.uniform(k, shape, jnp.float32, -bound, bound)

    ks = jax.random.split(key, 10)
    return {
        "conv1_w": uni(ks[0], (6, 3, 5, 5), 3 * 5 * 5),
        "conv1_b": uni(ks[1], (6,), 3 * 5 * 5),
        "conv2_w": uni(ks[2], (16, 6, 5, 5), 6 * 5 * 5),
        "conv2_b": uni(ks[3], (16,), 6 * 5 * 5),
        "fc1_w": uni(ks[4], (120, 400), 400),
        "fc1_b": uni(ks[5], (120,), 400),
        "fc2_w": uni(ks[6], (84, 120), 120),
        "fc2_b": uni(ks[7], (84,), 120),
        "fc3_w": uni(ks[8], (10, 84), 84),
        "fc3_b": uni(ks[9], (10,), 84),
    }


def net_forward(params, x, *, tm=512, max_bt=32):
    # x: (B, 3, 32, 32) NCHW, float32
    B = x.shape[0]
    f32, bf16 = jnp.float32, jnp.bfloat16
    cparams = pltpu.CompilerParams(dimension_semantics=("parallel",),
                                   vmem_limit_bytes=32 * 1024 * 1024)

    # ---- stage 1: conv1 + ReLU + 2x2 max-pool (gridded over M) --------------
    M = B * 14 * 14
    m_pad = pl.cdiv(M, tm) * tm
    p1 = _pool_patches_T(x, 5, 5)                                  # (4, 75, M)
    p1 = jnp.pad(p1, ((0, 0), (0, 0), (0, m_pad - M))).astype(bf16)
    w1 = jnp.pad(params["conv1_w"].reshape(6, 75), ((0, 2), (0, 0))).astype(bf16)
    b1 = jnp.pad(params["conv1_b"], (0, 2)).reshape(8, 1).astype(f32)

    pooled1 = pl.pallas_call(
        _conv1_pool_kernel,
        out_shape=jax.ShapeDtypeStruct((8, m_pad), f32),
        grid=(m_pad // tm,),
        in_specs=[pl.BlockSpec((4, 75, tm), lambda i: (0, 0, i)),
                  pl.BlockSpec((8, 75), lambda i: (0, 0)),
                  pl.BlockSpec((8, 1), lambda i: (0, 0))],
        out_specs=pl.BlockSpec((8, tm), lambda i: (0, i)),
        compiler_params=cparams,
    )(p1, w1, b1)
    # pooled1: (8, m_pad), rows 0..5 = channels, columns ordered (b, oh, ow)

    # ---- stage 2: conv2 + ReLU + pool + fc1 + fc2 + fc3 (gridded over B) -----
    bt = min(max_bt, -(-B // 8) * 8)          # batch tile, multiple of 8
    b_pad = pl.cdiv(B, bt) * bt
    ntiles = b_pad // bt

    act1 = pooled1[:6, :M].reshape(6, B, 14, 14).transpose(1, 0, 2, 3)
    act1 = jnp.pad(act1, ((0, b_pad - B), (0, 0), (0, 0), (0, 0)))
    p2 = _pool_patches4(act1, 5, 5)                                # (4,25,b_pad,150)
    p2 = (p2.reshape(4, 25, ntiles, bt, 150)
            .transpose(2, 0, 1, 3, 4)                              # (nt,4,25,bt,150)
            .reshape(ntiles, 100 * bt, 150)
            .astype(bf16))

    w2 = params["conv2_w"].reshape(16, 150).T.astype(bf16)          # (150, 16)
    b2 = params["conv2_b"].reshape(1, 16).astype(f32)
    # fc1 weight re-ordered to the kernel's hw-major flatten layout:
    # fc1w_k[hw*16 + c, o] = fc1_w[o, c*25 + hw]
    fc1w = (params["fc1_w"].reshape(120, 16, 25)
            .transpose(2, 1, 0).reshape(400, 120).astype(f32))
    fc1b = params["fc1_b"].reshape(1, 120).astype(f32)
    fc2w = params["fc2_w"].T.astype(f32)
    fc2b = params["fc2_b"].reshape(1, 84).astype(f32)
    fc3w = params["fc3_w"].T.astype(f32)
    fc3b = params["fc3_b"].reshape(1, 10).astype(f32)

    _c2 = lambda i: (0, 0)   # constant-block index map for weights/biases

    out = pl.pallas_call(
        functools.partial(_conv2_pool_fc_kernel, bt=bt),
        out_shape=jax.ShapeDtypeStruct((b_pad, 10), f32),
        grid=(ntiles,),
        in_specs=[pl.BlockSpec((1, 100 * bt, 150), lambda i: (i, 0, 0)),
                  pl.BlockSpec((150, 16), _c2), pl.BlockSpec((1, 16), _c2),
                  pl.BlockSpec((400, 120), _c2), pl.BlockSpec((1, 120), _c2),
                  pl.BlockSpec((120, 84), _c2), pl.BlockSpec((1, 84), _c2),
                  pl.BlockSpec((84, 10), _c2), pl.BlockSpec((1, 10), _c2)],
        out_specs=pl.BlockSpec((bt, 10), lambda i: (i, 0)),
        scratch_shapes=[pltpu.VMEM((bt, 400), f32)],
        compiler_params=cparams,
    )(p2, w2, b2, fc1w, fc1b, fc2w, fc2b, fc3w, fc3b)

    return out[:B]


# ------------------------------ pure-JAX reference ---------------------------

def net_reference(params, x):
    def conv(x, w, b):
        y = jax.lax.conv_general_dilated(
            x, w, (1, 1), "VALID", dimension_numbers=("NCHW", "OIHW", "NCHW"))
        return y + b.reshape(1, -1, 1, 1)

    def pool(x):
        return jax.lax.reduce_window(x, -jnp.inf, jax.lax.max,
                                     (1, 1, 2, 2), (1, 1, 2, 2), "VALID")

    y = pool(jax.nn.relu(conv(x, params["conv1_w"], params["conv1_b"])))
    y = pool(jax.nn.relu(conv(y, params["conv2_w"], params["conv2_b"])))
    y = y.reshape(y.shape[0], -1)
    y = jax.nn.relu(y @ params["fc1_w"].T + params["fc1_b"])
    y = jax.nn.relu(y @ params["fc2_w"].T + params["fc2_b"])
    return y @ params["fc3_w"].T + params["fc3_b"]


if __name__ == "__main__":
    key = jax.random.PRNGKey(0)
    pkey, xkey = jax.random.split(key)
    params = init_params(pkey)
    x = jax.random.normal(xkey, (2, 3, 32, 32), dtype=jnp.float32)

    out = jax.jit(net_forward)(params, x)
    out = jax.block_until_ready(out)
    assert out.shape == (2, 10) and out.dtype == jnp.float32
    assert bool(jnp.all(jnp.isfinite(out)))

    ref = net_reference(params, x)
    max_err = float(jnp.max(jnp.abs(out - ref)))
    assert max_err < 0.1, f"mismatch vs reference: {max_err}"

    print("KERNEL_OK")
</pallas_src>

<mosaic_0001>
module attributes {stable_mosaic.version = 11 : i64} {
  func.func @_conv1_pool_kernel(%arg0: i32, %arg1: memref<4x75x512xbf16, #tpu.memory_space<vmem>>, %arg2: memref<8x75xbf16, #tpu.memory_space<vmem>>, %arg3: memref<8x1xf32, #tpu.memory_space<vmem>>, %arg4: memref<8x512xf32, #tpu.memory_space<vmem>>) attributes {dimension_semantics = [#tpu.dimension_semantics<parallel>], iteration_bounds = array<i64: 1>, scalar_prefetch = 0 : i64, scratch_operands = 0 : i64, tpu.core_type = #tpu.core_type<tc>, window_params = [{transform_indices = @transform_0, window_bounds = array<i64: 4, 75, 512>}, {pipeline_mode = #tpu.pipeline_mode<synchronous>, transform_indices = @transform_1, window_bounds = array<i64: 8, 75>}, {pipeline_mode = #tpu.pipeline_mode<synchronous>, transform_indices = @transform_2, window_bounds = array<i64: 8, 1>}, {transform_indices = @transform_3, window_bounds = array<i64: 8, 512>}]} {
    %c0 = arith.constant 0 : index
    %c0_0 = arith.constant 0 : index
    %0 = vector.load %arg2[%c0, %c0_0] : memref<8x75xbf16, #tpu.memory_space<vmem>>, vector<8x75xbf16>
    %c0_1 = arith.constant 0 : index
    %c0_2 = arith.constant 0 : index
    %c0_3 = arith.constant 0 : index
    %1 = vector.load %arg1[%c0_1, %c0_2, %c0_3] : memref<4x75x512xbf16, #tpu.memory_space<vmem>>, vector<1x75x512xbf16>
    %2 = vector.shape_cast %1 : vector<1x75x512xbf16> to vector<75x512xbf16>
    %cst = arith.constant dense<0.000000e+00> : vector<8x512xf32>
    %3 = tpu.matmul %0, %2, %cst {dimension_numbers = #tpu.dot_dimension_numbers<[1], [0], [0], [1], [0, 0, 1, 1], [], []>} : vector<8x75xbf16>, vector<75x512xbf16>, vector<8x512xf32> -> vector<8x512xf32>
    %c1 = arith.constant 1 : index
    %c0_4 = arith.constant 0 : index
    %c0_5 = arith.constant 0 : index
    %4 = vector.load %arg1[%c1, %c0_4, %c0_5] : memref<4x75x512xbf16, #tpu.memory_space<vmem>>, vector<1x75x512xbf16>
    %5 = vector.shape_cast %4 : vector<1x75x512xbf16> to vector<75x512xbf16>
    %cst_6 = arith.constant dense<0.000000e+00> : vector<8x512xf32>
    %6 = tpu.matmul %0, %5, %cst_6 {dimension_numbers = #tpu.dot_dimension_numbers<[1], [0], [0], [1], [0, 0, 1, 1], [], []>} : vector<8x75xbf16>, vector<75x512xbf16>, vector<8x512xf32> -> vector<8x512xf32>
    %c2 = arith.constant 2 : index
    %c0_7 = arith.constant 0 : index
    %c0_8 = arith.constant 0 : index
    %7 = vector.load %arg1[%c2, %c0_7, %c0_8] : memref<4x75x512xbf16, #tpu.memory_space<vmem>>, vector<1x75x512xbf16>
    %8 = vector.shape_cast %7 : vector<1x75x512xbf16> to vector<75x512xbf16>
    %cst_9 = arith.constant dense<0.000000e+00> : vector<8x512xf32>
    %9 = tpu.matmul %0, %8, %cst_9 {dimension_numbers = #tpu.dot_dimension_numbers<[1], [0], [0], [1], [0, 0, 1, 1], [], []>} : vector<8x75xbf16>, vector<75x512xbf16>, vector<8x512xf32> -> vector<8x512xf32>
    %c3 = arith.constant 3 : index
    %c0_10 = arith.constant 0 : index
    %c0_11 = arith.constant 0 : index
    %10 = vector.load %arg1[%c3, %c0_10, %c0_11] : memref<4x75x512xbf16, #tpu.memory_space<vmem>>, vector<1x75x512xbf16>
    %11 = vector.shape_cast %10 : vector<1x75x512xbf16> to vector<75x512xbf16>
    %cst_12 = arith.constant dense<0.000000e+00> : vector<8x512xf32>
    %12 = tpu.matmul %0, %11, %cst_12 {dimension_numbers = #tpu.dot_dimension_numbers<[1], [0], [0], [1], [0, 0, 1, 1], [], []>} : vector<8x75xbf16>, vector<75x512xbf16>, vector<8x512xf32> -> vector<8x512xf32>
    %13 = arith.maximumf %3, %6 : vector<8x512xf32>
    %14 = arith.maximumf %9, %12 : vector<8x512xf32>
    %15 = arith.maximumf %13, %14 : vector<8x512xf32>
    %c0_13 = arith.constant 0 : index
    %c0_14 = arith.constant 0 : index
    %16 = vector.load %arg3[%c0_13, %c0_14] : memref<8x1xf32, #tpu.memory_space<vmem>>, vector<8x1xf32>
    %17 = vector.broadcast %16 : vector<8x1xf32> to vector<8x512xf32>
    %18 = arith.addf %15, %17 : vector<8x512xf32>
    %cst_15 = arith.constant 0.000000e+00 : f32
    %19 = vector.broadcast %cst_15 : f32 to vector<8x512xf32>
    %20 = arith.maximumf %18, %19 : vector<8x512xf32>
    %c0_16 = arith.constant 0 : index
    %c0_17 = arith.constant 0 : index
    %21 = vector.load %arg4[%c0_16, %c0_17] : memref<8x512xf32, #tpu.memory_space<vmem>>, vector<8x512xf32>
    tpu.vector_store %arg4[%c0_16, %c0_17], %20 {strides = array<i32>} : memref<8x512xf32, #tpu.memory_space<vmem>>, vector<8x512xf32>,
    return
  }
  func.func @transform_0(%arg0: i32) -> (i32, i32, i32) {
    %c0_i32 = arith.constant 0 : i32
    %c0_i32_0 = arith.constant 0 : i32
    %c0_i32_1 = arith.constant 0 : i32
    return %c0_i32, %c0_i32_0, %arg0 : i32, i32, i32
  }
  func.func @transform_1(%arg0: i32) -> (i32, i32) {
    %c0_i32 = arith.constant 0 : i32
    %c0_i32_0 = arith.constant 0 : i32
    %c0_i32_1 = arith.constant 0 : i32
    return %c0_i32, %c0_i32_0 : i32, i32
  }
  func.func @transform_2(%arg0: i32) -> (i32, i32) {
    %c0_i32 = arith.constant 0 : i32
    %c0_i32_0 = arith.constant 0 : i32
    %c0_i32_1 = arith.constant 0 : i32
    return %c0_i32, %c0_i32_0 : i32, i32
  }
  func.func @transform_3(%arg0: i32) -> (i32, i32) {
    %c0_i32 = arith.constant 0 : i32
    %c0_i32_0 = arith.constant 0 : i32
    return %c0_i32, %arg0 : i32, i32
  }
}

module attributes {stable_mosaic.version = 11 : i64} {
  func.func @_conv2_pool_fc_kernel(%arg0: i32, %arg1: memref<1x800x150xbf16, #tpu.memory_space<vmem>>, %arg2: memref<150x16xbf16, #tpu.memory_space<vmem>>, %arg3: memref<1x16xf32, #tpu.memory_space<vmem>>, %arg4: memref<400x120xf32, #tpu.memory_space<vmem>>, %arg5: memref<1x120xf32, #tpu.memory_space<vmem>>, %arg6: memref<120x84xf32, #tpu.memory_space<vmem>>, %arg7: memref<1x84xf32, #tpu.memory_space<vmem>>, %arg8: memref<84x10xf32, #tpu.memory_space<vmem>>, %arg9: memref<1x10xf32, #tpu.memory_space<vmem>>, %arg10: memref<8x10xf32, #tpu.memory_space<vmem>>, %arg11: memref<8x400xf32, #tpu.memory_space<vmem>>) attributes {dimension_semantics = [#tpu.dimension_semantics<parallel>], iteration_bounds = array<i64: 1>, scalar_prefetch = 0 : i64, scratch_operands = 1 : i64, tpu.core_type = #tpu.core_type<tc>, window_params = [{transform_indices = @transform_0, window_bounds = array<i64: 1, 800, 150>}, {pipeline_mode = #tpu.pipeline_mode<synchronous>, transform_indices = @transform_1, window_bounds = array<i64: 150, 16>}, {pipeline_mode = #tpu.pipeline_mode<synchronous>, transform_indices = @transform_2, window_bounds = array<i64: 1, 16>}, {pipeline_mode = #tpu.pipeline_mode<synchronous>, transform_indices = @transform_3, window_bounds = array<i64: 400, 120>}, {pipeline_mode = #tpu.pipeline_mode<synchronous>, transform_indices = @transform_4, window_bounds = array<i64: 1, 120>}, {pipeline_mode = #tpu.pipeline_mode<synchronous>, transform_indices = @transform_5, window_bounds = array<i64: 120, 84>}, {pipeline_mode = #tpu.pipeline_mode<synchronous>, transform_indices = @transform_6, window_bounds = array<i64: 1, 84>}, {pipeline_mode = #tpu.pipeline_mode<synchronous>, transform_indices = @transform_7, window_bounds = array<i64: 84, 10>}, {pipeline_mode = #tpu.pipeline_mode<synchronous>, transform_indices = @transform_8, window_bounds = array<i64: 1, 10>}, {transform_indices = @transform_9, window_bounds = array<i64: 8, 10>}]} {
    %c0 = arith.constant 0 : index
    %c0_0 = arith.constant 0 : index
    %c0_1 = arith.constant 0 : index
    %0 = vector.load %arg1[%c0, %c0_0, %c0_1] : memref<1x800x150xbf16, #tpu.memory_space<vmem>>, vector<1x800x150xbf16>
    %1 = vector.shape_cast %0 : vector<1x800x150xbf16> to vector<800x150xbf16>
    %c0_2 = arith.constant 0 : index
    %c0_3 = arith.constant 0 : index
    %2 = vector.load %arg2[%c0_2, %c0_3] : memref<150x16xbf16, #tpu.memory_space<vmem>>, vector<150x16xbf16>
    %cst = arith.constant dense<0.000000e+00> : vector<800x16xf32>
    %3 = tpu.matmul %1, %2, %cst {dimension_numbers = #tpu.dot_dimension_numbers<[1], [0], [0], [1], [0, 0, 1, 1], [], []>} : vector<800x150xbf16>, vector<150x16xbf16>, vector<800x16xf32> -> vector<800x16xf32>
    %4 = vector.extract_strided_slice %3 {offsets = [0, 0], sizes = [200, 16], strides = [1, 1]} : vector<800x16xf32> to vector<200x16xf32>
    %5 = vector.extract_strided_slice %3 {offsets = [200, 0], sizes = [200, 16], strides = [1, 1]} : vector<800x16xf32> to vector<200x16xf32>
    %6 = arith.maximumf %4, %5 : vector<200x16xf32>
    %7 = vector.extract_strided_slice %3 {offsets = [400, 0], sizes = [200, 16], strides = [1, 1]} : vector<800x16xf32> to vector<200x16xf32>
    %8 = vector.extract_strided_slice %3 {offsets = [600, 0], sizes = [200, 16], strides = [1, 1]} : vector<800x16xf32> to vector<200x16xf32>
    %9 = arith.maximumf %7, %8 : vector<200x16xf32>
    %10 = arith.maximumf %6, %9 : vector<200x16xf32>
    %c0_4 = arith.constant 0 : index
    %c0_5 = arith.constant 0 : index
    %11 = vector.load %arg3[%c0_4, %c0_5] : memref<1x16xf32, #tpu.memory_space<vmem>>, vector<1x16xf32>
    %12 = vector.broadcast %11 : vector<1x16xf32> to vector<200x16xf32>
    %13 = arith.addf %10, %12 : vector<200x16xf32>
    %cst_6 = arith.constant 0.000000e+00 : f32
    %14 = vector.broadcast %cst_6 : f32 to vector<200x16xf32>
    %15 = arith.maximumf %13, %14 : vector<200x16xf32>
    %16 = vector.extract_strided_slice %15 {offsets = [0, 0], sizes = [8, 16], strides = [1, 1]} : vector<200x16xf32> to vector<8x16xf32>
    %c0_7 = arith.constant 0 : index
    %c0_8 = arith.constant 0 : index
    %17 = vector.load %arg11[%c0_7, %c0_8] : memref<8x400xf32, #tpu.memory_space<vmem>>, vector<8x16xf32>
    tpu.vector_store %arg11[%c0_7, %c0_8], %16 {strides = array<i32>} : memref<8x400xf32, #tpu.memory_space<vmem>>, vector<8x16xf32>,
    %18 = vector.extract_strided_slice %15 {offsets = [8, 0], sizes = [8, 16], strides = [1, 1]} : vector<200x16xf32> to vector<8x16xf32>
    %c0_9 = arith.constant 0 : index
    %c16 = arith.constant 16 : index
    %19 = vector.load %arg11[%c0_9, %c16] : memref<8x400xf32, #tpu.memory_space<vmem>>, vector<8x16xf32>
    tpu.vector_store %arg11[%c0_9, %c16], %18 {strides = array<i32>} : memref<8x400xf32, #tpu.memory_space<vmem>>, vector<8x16xf32>,
    %20 = vector.extract_strided_slice %15 {offsets = [16, 0], sizes = [8, 16], strides = [1, 1]} : vector<200x16xf32> to vector<8x16xf32>
    %c0_10 = arith.constant 0 : index
    %c32 = arith.constant 32 : index
    %21 = vector.load %arg11[%c0_10, %c32] : memref<8x400xf32, #tpu.memory_space<vmem>>, vector<8x16xf32>
    tpu.vector_store %arg11[%c0_10, %c32], %20 {strides = array<i32>} : memref<8x400xf32, #tpu.memory_space<vmem>>, vector<8x16xf32>,
    %22 = vector.extract_strided_slice %15 {offsets = [24, 0], sizes = [8, 16], strides = [1, 1]} : vector<200x16xf32> to vector<8x16xf32>
    %c0_11 = arith.constant 0 : index
    %c48 = arith.constant 48 : index
    %23 = vector.load %arg11[%c0_11, %c48] : memref<8x400xf32, #tpu.memory_space<vmem>>, vector<8x16xf32>
    tpu.vector_store %arg11[%c0_11, %c48], %22 {strides = array<i32>} : memref<8x400xf32, #tpu.memory_space<vmem>>, vector<8x16xf32>,
    %24 = vector.extract_strided_slice %15 {offsets = [32, 0], sizes = [8, 16], strides = [1, 1]} : vector<200x16xf32> to vector<8x16xf32>
    %c0_12 = arith.constant 0 : index
    %c64 = arith.constant 64 : index
    %25 = vector.load %arg11[%c0_12, %c64] : memref<8x400xf32, #tpu.memory_space<vmem>>, vector<8x16xf32>
    tpu.vector_store %arg11[%c0_12, %c64], %24 {strides = array<i32>} : memref<8x400xf32, #tpu.memory_space<vmem>>, vector<8x16xf32>,
    %26 = vector.extract_strided_slice %15 {offsets = [40, 0], sizes = [8, 16], strides = [1, 1]} : vector<200x16xf32> to vector<8x16xf32>
    %c0_13 = arith.constant 0 : index
    %c80 = arith.constant 80 : index
    %27 = vector.load %arg11[%c0_13, %c80] : memref<8x400xf32, #tpu.memory_space<vmem>>, vector<8x16xf32>
    tpu.vector_store %arg11[%c0_13, %c80], %26 {strides = array<i32>} : memref<8x400xf32, #tpu.memory_space<vmem>>, vector<8x16xf32>,
    %28 = vector.extract_strided_slice %15 {offsets = [48, 0], sizes = [8, 16], strides = [1, 1]} : vector<200x16xf32> to vector<8x16xf32>
    %c0_14 = arith.constant 0 : index
    %c96 = arith.constant 96 : index
    %29 = vector.load %arg11[%c0_14, %c96] : memref<8x400xf32, #tpu.memory_space<vmem>>, vector<8x16xf32>
    tpu.vector_store %arg11[%c0_14, %c96], %28 {strides = array<i32>} : memref<8x400xf32, #tpu.memory_space<vmem>>, vector<8x16xf32>,
    %30 = vector.extract_strided_slice %15 {offsets = [56, 0], sizes = [8, 16], strides = [1, 1]} : vector<200x16xf32> to vector<8x16xf32>
    %c0_15 = arith.constant 0 : index
    %c112 = arith.constant 112 : index
    %31 = vector.load %arg11[%c0_15, %c112] : memref<8x400xf32, #tpu.memory_space<vmem>>, vector<8x16xf32>
    tpu.vector_store %arg11[%c0_15, %c112], %30 {strides = array<i32>} : memref<8x400xf32, #tpu.memory_space<vmem>>, vector<8x16xf32>,
    %32 = vector.extract_strided_slice %15 {offsets = [64, 0], sizes = [8, 16], strides = [1, 1]} : vector<200x16xf32> to vector<8x16xf32>
    %c0_16 = arith.constant 0 : index
    %c128 = arith.constant 128 : index
    %33 = vector.load %arg11[%c0_16, %c128] : memref<8x400xf32, #tpu.memory_space<vmem>>, vector<8x16xf32>
    tpu.vector_store %arg11[%c0_16, %c128], %32 {strides = array<i32>} : memref<8x400xf32, #tpu.memory_space<vmem>>, vector<8x16xf32>,
    %34 = vector.extract_strided_slice %15 {offsets = [72, 0], sizes = [8, 16], strides = [1, 1]} : vector<200x16xf32> to vector<8x16xf32>
    %c0_17 = arith.constant 0 : index
    %c144 = arith.constant 144 : index
    %35 = vector.load %arg11[%c0_17, %c144] : memref<8x400xf32, #tpu.memory_space<vmem>>, vector<8x16xf32>
    tpu.vector_store %arg11[%c0_17, %c144], %34 {strides = array<i32>} : memref<8x400xf32, #tpu.memory_space<vmem>>, vector<8x16xf32>,
    %36 = vector.extract_strided_slice %15 {offsets = [80, 0], sizes = [8, 16], strides = [1, 1]} : vector<200x16xf32> to vector<8x16xf32>
    %c0_18 = arith.constant 0 : index
    %c160 = arith.constant 160 : index
    %37 = vector.load %arg11[%c0_18, %c160] : memref<8x400xf32, #tpu.memory_space<vmem>>, vector<8x16xf32>
    tpu.vector_store %arg11[%c0_18, %c160], %36 {strides = array<i32>} : memref<8x400xf32, #tpu.memory_space<vmem>>, vector<8x16xf32>,
    %38 = vector.extract_strided_slice %15 {offsets = [88, 0], sizes = [8, 16], strides = [1, 1]} : vector<200x16xf32> to vector<8x16xf32>
    %c0_19 = arith.constant 0 : index
    %c176 = arith.constant 176 : index
    %39 = vector.load %arg11[%c0_19, %c176] : memref<8x400xf32, #tpu.memory_space<vmem>>, vector<8x16xf32>
    tpu.vector_store %arg11[%c0_19, %c176], %38 {strides = array<i32>} : memref<8x400xf32, #tpu.memory_space<vmem>>, vector<8x16xf32>,
    %40 = vector.extract_strided_slice %15 {offsets = [96, 0], sizes = [8, 16], strides = [1, 1]} : vector<200x16xf32> to vector<8x16xf32>
    %c0_20 = arith.constant 0 : index
    %c192 = arith.constant 192 : index
    %41 = vector.load %arg11[%c0_20, %c192] : memref<8x400xf32, #tpu.memory_space<vmem>>, vector<8x16xf32>
    tpu.vector_store %arg11[%c0_20, %c192], %40 {strides = array<i32>} : memref<8x400xf32, #tpu.memory_space<vmem>>, vector<8x16xf32>,
    %42 = vector.extract_strided_slice %15 {offsets = [104, 0], sizes = [8, 16], strides = [1, 1]} : vector<200x16xf32> to vector<8x16xf32>
    %c0_21 = arith.constant 0 : index
    %c208 = arith.constant 208 : index
    %43 = vector.load %arg11[%c0_21, %c208] : memref<8x400xf32, #tpu.memory_space<vmem>>, vector<8x16xf32>
    tpu.vector_store %arg11[%c0_21, %c208], %42 {strides = array<i32>} : memref<8x400xf32, #tpu.memory_space<vmem>>, vector<8x16xf32>,
    %44 = vector.extract_strided_slice %15 {offsets = [112, 0], sizes = [8, 16], strides = [1, 1]} : vector<200x16xf32> to vector<8x16xf32>
    %c0_22 = arith.constant 0 : index
    %c224 = arith.constant 224 : index
    %45 = vector.load %arg11[%c0_22, %c224] : memref<8x400xf32, #tpu.memory_space<vmem>>, vector<8x16xf32>
    tpu.vector_store %arg11[%c0_22, %c224], %44 {strides = array<i32>} : memref<8x400xf32, #tpu.memory_space<vmem>>, vector<8x16xf32>,
    %46 = vector.extract_strided_slice %15 {offsets = [120, 0], sizes = [8, 16], strides = [1, 1]} : vector<200x16xf32> to vector<8x16xf32>
    %c0_23 = arith.constant 0 : index
    %c240 = arith.constant 240 : index
    %47 = vector.load %arg11[%c0_23, %c240] : memref<8x400xf32, #tpu.memory_space<vmem>>, vector<8x16xf32>
    tpu.vector_store %arg11[%c0_23, %c240], %46 {strides = array<i32>} : memref<8x400xf32, #tpu.memory_space<vmem>>, vector<8x16xf32>,
    %48 = vector.extract_strided_slice %15 {offsets = [128, 0], sizes = [8, 16], strides = [1, 1]} : vector<200x16xf32> to vector<8x16xf32>
    %c0_24 = arith.constant 0 : index
    %c256 = arith.constant 256 : index
    %49 = vector.load %arg11[%c0_24, %c256] : memref<8x400xf32, #tpu.memory_space<vmem>>, vector<8x16xf32>
    tpu.vector_store %arg11[%c0_24, %c256], %48 {strides = array<i32>} : memref<8x400xf32, #tpu.memory_space<vmem>>, vector<8x16xf32>,
    %50 = vector.extract_strided_slice %15 {offsets = [136, 0], sizes = [8, 16], strides = [1, 1]} : vector<200x16xf32> to vector<8x16xf32>
    %c0_25 = arith.constant 0 : index
    %c272 = arith.constant 272 : index
    %51 = vector.load %arg11[%c0_25, %c272] : memref<8x400xf32, #tpu.memory_space<vmem>>, vector<8x16xf32>
    tpu.vector_store %arg11[%c0_25, %c272], %50 {strides = array<i32>} : memref<8x400xf32, #tpu.memory_space<vmem>>, vector<8x16xf32>,
    %52 = vector.extract_strided_slice %15 {offsets = [144, 0], sizes = [8, 16], strides = [1, 1]} : vector<200x16xf32> to vector<8x16xf32>
    %c0_26 = arith.constant 0 : index
    %c288 = arith.constant 288 : index
    %53 = vector.load %arg11[%c0_26, %c288] : memref<8x400xf32, #tpu.memory_space<vmem>>, vector<8x16xf32>
    tpu.vector_store %arg11[%c0_26, %c288], %52 {strides = array<i32>} : memref<8x400xf32, #tpu.memory_space<vmem>>, vector<8x16xf32>,
    %54 = vector.extract_strided_slice %15 {offsets = [152, 0], sizes = [8, 16], strides = [1, 1]} : vector<200x16xf32> to vector<8x16xf32>
    %c0_27 = arith.constant 0 : index
    %c304 = arith.constant 304 : index
    %55 = vector.load %arg11[%c0_27, %c304] : memref<8x400xf32, #tpu.memory_space<vmem>>, vector<8x16xf32>
    tpu.vector_store %arg11[%c0_27, %c304], %54 {strides = array<i32>} : memref<8x400xf32, #tpu.memory_space<vmem>>, vector<8x16xf32>,
    %56 = vector.extract_strided_slice %15 {offsets = [160, 0], sizes = [8, 16], strides = [1, 1]} : vector<200x16xf32> to vector<8x16xf32>
    %c0_28 = arith.constant 0 : index
    %c320 = arith.constant 320 : index
    %57 = vector.load %arg11[%c0_28, %c320] : memref<8x400xf32, #tpu.memory_space<vmem>>, vector<8x16xf32>
    tpu.vector_store %arg11[%c0_28, %c320], %56 {strides = array<i32>} : memref<8x400xf32, #tpu.memory_space<vmem>>, vector<8x16xf32>,
    %58 = vector.extract_strided_slice %15 {offsets = [168, 0], sizes = [8, 16], strides = [1, 1]} : vector<200x16xf32> to vector<8x16xf32>
    %c0_29 = arith.constant 0 : index
    %c336 = arith.constant 336 : index
    %59 = vector.load %arg11[%c0_29, %c336] : memref<8x400xf32, #tpu.memory_space<vmem>>, vector<8x16xf32>
    tpu.vector_store %arg11[%c0_29, %c336], %58 {strides = array<i32>} : memref<8x400xf32, #tpu.memory_space<vmem>>, vector<8x16xf32>,
    %60 = vector.extract_strided_slice %15 {offsets = [176, 0], sizes = [8, 16], strides = [1, 1]} : vector<200x16xf32> to vector<8x16xf32>
    %c0_30 = arith.constant 0 : index
    %c352 = arith.constant 352 : index
    %61 = vector.load %arg11[%c0_30, %c352] : memref<8x400xf32, #tpu.memory_space<vmem>>, vector<8x16xf32>
    tpu.vector_store %arg11[%c0_30, %c352], %60 {strides = array<i32>} : memref<8x400xf32, #tpu.memory_space<vmem>>, vector<8x16xf32>,
    %62 = vector.extract_strided_slice %15 {offsets = [184, 0], sizes = [8, 16], strides = [1, 1]} : vector<200x16xf32> to vector<8x16xf32>
    %c0_31 = arith.constant 0 : index
    %c368 = arith.constant 368 : index
    %63 = vector.load %arg11[%c0_31, %c368] : memref<8x400xf32, #tpu.memory_space<vmem>>, vector<8x16xf32>
    tpu.vector_store %arg11[%c0_31, %c368], %62 {strides = array<i32>} : memref<8x400xf32, #tpu.memory_space<vmem>>, vector<8x16xf32>,
    %64 = vector.extract_strided_slice %15 {offsets = [192, 0], sizes = [8, 16], strides = [1, 1]} : vector<200x16xf32> to vector<8x16xf32>
    %c0_32 = arith.constant 0 : index
    %c384 = arith.constant 384 : index
    %65 = vector.load %arg11[%c0_32, %c384] : memref<8x400xf32, #tpu.memory_space<vmem>>, vector<8x16xf32>
    tpu.vector_store %arg11[%c0_32, %c384], %64 {strides = array<i32>} : memref<8x400xf32, #tpu.memory_space<vmem>>, vector<8x16xf32>,
    %c0_33 = arith.constant 0 : index
    %c0_34 = arith.constant 0 : index
    %66 = vector.load %arg11[%c0_33, %c0_34] : memref<8x400xf32, #tpu.memory_space<vmem>>, vector<8x400xf32>
    %c0_35 = arith.constant 0 : index
    %c0_36 = arith.constant 0 : index
    %67 = vector.load %arg4[%c0_35, %c0_36] : memref<400x120xf32, #tpu.memory_space<vmem>>, vector<400x120xf32>
    %cst_37 = arith.constant dense<0.000000e+00> : vector<8x120xf32>
    %68 = tpu.matmul %66, %67, %cst_37 {dimension_numbers = #tpu.dot_dimension_numbers<[1], [0], [0], [1], [0, 0, 1, 1], [], []>} : vector<8x400xf32>, vector<400x120xf32>, vector<8x120xf32> -> vector<8x120xf32>
    %c0_38 = arith.constant 0 : index
    %c0_39 = arith.constant 0 : index
    %69 = vector.load %arg5[%c0_38, %c0_39] : memref<1x120xf32, #tpu.memory_space<vmem>>, vector<1x120xf32>
    %70 = vector.broadcast %69 : vector<1x120xf32> to vector<8x120xf32>
    %71 = arith.addf %68, %70 : vector<8x120xf32>
    %cst_40 = arith.constant 0.000000e+00 : f32
    %72 = vector.broadcast %cst_40 : f32 to vector<8x120xf32>
    %73 = arith.maximumf %71, %72 : vector<8x120xf32>
    %c0_41 = arith.constant 0 : index
    %c0_42 = arith.constant 0 : index
    %74 = vector.load %arg6[%c0_41, %c0_42] : memref<120x84xf32, #tpu.memory_space<vmem>>, vector<120x84xf32>
    %cst_43 = arith.constant dense<0.000000e+00> : vector<8x84xf32>
    %75 = tpu.matmul %73, %74, %cst_43 {dimension_numbers = #tpu.dot_dimension_numbers<[1], [0], [0], [1], [0, 0, 1, 1], [], []>} : vector<8x120xf32>, vector<120x84xf32>, vector<8x84xf32> -> vector<8x84xf32>
    %c0_44 = arith.constant 0 : index
    %c0_45 = arith.constant 0 : index
    %76 = vector.load %arg7[%c0_44, %c0_45] : memref<1x84xf32, #tpu.memory_space<vmem>>, vector<1x84xf32>
    %77 = vector.broadcast %76 : vector<1x84xf32> to vector<8x84xf32>
    %78 = arith.addf %75, %77 : vector<8x84xf32>
    %cst_46 = arith.constant 0.000000e+00 : f32
    %79 = vector.broadcast %cst_46 : f32 to vector<8x84xf32>
    %80 = arith.maximumf %78, %79 : vector<8x84xf32>
    %c0_47 = arith.constant 0 : index
    %c0_48 = arith.constant 0 : index
    %81 = vector.load %arg8[%c0_47, %c0_48] : memref<84x10xf32, #tpu.memory_space<vmem>>, vector<84x10xf32>
    %cst_49 = arith.constant dense<0.000000e+00> : vector<8x10xf32>
    %82 = tpu.matmul %80, %81, %cst_49 {dimension_numbers = #tpu.dot_dimension_numbers<[1], [0], [0], [1], [0, 0, 1, 1], [], []>} : vector<8x84xf32>, vector<84x10xf32>, vector<8x10xf32> -> vector<8x10xf32>
    %c0_50 = arith.constant 0 : index
    %c0_51 = arith.constant 0 : index
    %83 = vector.load %arg9[%c0_50, %c0_51] : memref<1x10xf32, #tpu.memory_space<vmem>>, vector<1x10xf32>
    %84 = vector.broadcast %83 : vector<1x10xf32> to vector<8x10xf32>
    %85 = arith.addf %82, %84 : vector<8x10xf32>
    %c0_52 = arith.constant 0 : index
    %c0_53 = arith.constant 0 : index
    %86 = vector.load %arg10[%c0_52, %c0_53] : memref<8x10xf32, #tpu.memory_space<vmem>>, vector<8x10xf32>
    tpu.vector_store %arg10[%c0_52, %c0_53], %85 {strides = array<i32>} : memref<8x10xf32, #tpu.memory_space<vmem>>, vector<8x10xf32>,
    return
  }
  func.func @transform_0(%arg0: i32) -> (i32, i32, i32) {
    %c0_i32 = arith.constant 0 : i32
    %c0_i32_0 = arith.constant 0 : i32
    %c0_i32_1 = arith.constant 0 : i32
    return %arg0, %c0_i32, %c0_i32_0 : i32, i32, i32
  }
  func.func @transform_1(%arg0: i32) -> (i32, i32) {
    %c0_i32 = arith.constant 0 : i32
    %c0_i32_0 = arith.constant 0 : i32
    %c0_i32_1 = arith.constant 0 : i32
    return %c0_i32, %c0_i32_0 : i32, i32
  }
  func.func @transform_2(%arg0: i32) -> (i32, i32) {
    %c0_i32 = arith.constant 0 : i32
    %c0_i32_0 = arith.constant 0 : i32
    %c0_i32_1 = arith.constant 0 : i32
    return %c0_i32, %c0_i32_0 : i32, i32
  }
  func.func @transform_3(%arg0: i32) -> (i32, i32) {
    %c0_i32 = arith.constant 0 : i32
    %c0_i32_0 = arith.constant 0 : i32
    %c0_i32_1 = arith.constant 0 : i32
    return %c0_i32, %c0_i32_0 : i32, i32
  }
  func.func @transform_4(%arg0: i32) -> (i32, i32) {
    %c0_i32 = arith.constant 0 : i32
    %c0_i32_0 = arith.constant 0 : i32
    %c0_i32_1 = arith.constant 0 : i32
    return %c0_i32, %c0_i32_0 : i32, i32
  }
  func.func @transform_5(%arg0: i32) -> (i32, i32) {
    %c0_i32 = arith.constant 0 : i32
    %c0_i32_0 = arith.constant 0 : i32
    %c0_i32_1 = arith.constant 0 : i32
    return %c0_i32, %c0_i32_0 : i32, i32
  }
  func.func @transform_6(%arg0: i32) -> (i32, i32) {
    %c0_i32 = arith.constant 0 : i32
    %c0_i32_0 = arith.constant 0 : i32
    %c0_i32_1 = arith.constant 0 : i32
    return %c0_i32, %c0_i32_0 : i32, i32
  }
  func.func @transform_7(%arg0: i32) -> (i32, i32) {
    %c0_i32 = arith.constant 0 : i32
    %c0_i32_0 = arith.constant 0 : i32
    %c0_i32_1 = arith.constant 0 : i32
    return %c0_i32, %c0_i32_0 : i32, i32
  }
  func.func @transform_8(%arg0: i32) -> (i32, i32) {
    %c0_i32 = arith.constant 0 : i32
    %c0_i32_0 = arith.constant 0 : i32
    %c0_i32_1 = arith.constant 0 : i32
    return %c0_i32, %c0_i32_0 : i32, i32
  }
  func.func @transform_9(%arg0: i32) -> (i32, i32) {
    %c0_i32 = arith.constant 0 : i32
    %c0_i32_0 = arith.constant 0 : i32
    return %arg0, %c0_i32 : i32, i32
  }
}

</mosaic_0001>

<llo_original>
// kernel: net_forward.2
$region0: #{net_forward.2}
  #allocation0 [shape = 'u32[]', space=smem, size = 0x4, offset = 0x4, fixed_abs, tag = 'smem constant byte address 0x4 - core index']
  #allocation1 [shape = 'u32[72,128]{1,0:T(1,128)}', space=vmem, size = 0x9000, scoped, tag = 'internal scratch']
  %s0 = inlined_call_operand.vmem [shape: bf16[4,75,512], index: 0, kind: input, shape index: {}]
  %s1 = inlined_call_operand.vmem [shape: bf16[8,75], index: 1, kind: input, shape index: {}]
  %s2 = inlined_call_operand.vmem [shape: f32[8,1], index: 2, kind: input, shape index: {}]
  %s3 = inlined_call_operand.vmem [shape: f32[8,512], index: 3, kind: output, shape index: {}]
  %s4 = sld [smem:[#allocation0]]
  $region22: #{net_forward.2} parent=0
    _
  %s6 = ssub.s32 1, %s4
  %s7 = scalar_select 0, %s6, %s4
  // Predicated region
  $region2: #{net_forward.2} parent=0 // pred_check
    _
  $region3: #{net_forward.2} parent=0 // pred_check_branch
    %9 = sbr.rel (0) target = $region5
  $region4: #{net_forward.2} parent=0 // pred_region
    _
  $region5: #{net_forward.2} parent=0 // pred_fallthru
    _
  // Predicated region
  $region6: #{net_forward.2} parent=0 // pred_check
    _
  $region7: #{net_forward.2} parent=0 // pred_check_branch
    %11 = sbr.rel (0) target = $region9
  $region8: #{net_forward.2} parent=0 // pred_region
    _
  $region9: #{net_forward.2} parent=0 // pred_fallthru
    _
  // Predicated region
  $region10: #{net_forward.2} parent=0 // pred_check
    _
  $region11: #{net_forward.2} parent=0 // pred_check_branch
    %13 = sbr.rel (0) target = $region13
  $region12: #{net_forward.2} parent=0 // pred_region
    _
  $region13: #{net_forward.2} parent=0 // pred_fallthru
    _
  %v15 = vld [vmem:[%s1] sm:$0xf]
  %v16 = vld [vmem:[%s0] sm:$0xff]
  %v17 = vld [vmem:[%s0 + $0x8] sm:$0xff]
  %v18 = vld [vmem:[%s0 + $0x10] sm:$0xff]
  %v19 = vld [vmem:[%s0 + $0x18] sm:$0xff]
  %v20 = vld [vmem:[%s0 + $0x20] sm:$0xff]
  %v21 = vld [vmem:[%s0 + $0x28] sm:$0xff]
  %v22 = vld [vmem:[%s0 + $0x30] sm:$0xff]
  %v23 = vld [vmem:[%s0 + $0x38] sm:$0xff]
  %v24 = vld [vmem:[%s0 + $0x40] sm:$0xff]
  %v25 = vld [vmem:[%s0 + $0x48] sm:$0xff]
  %v26 = vld [vmem:[%s0 + $0x50] sm:$0xff]
  %v27 = vld [vmem:[%s0 + $0x58] sm:$0xff]
  %v28 = vld [vmem:[%s0 + $0x60] sm:$0xff]
  %v29 = vld [vmem:[%s0 + $0x68] sm:$0xff]
  %v30 = vld [vmem:[%s0 + $0x70] sm:$0xff]
  %v31 = vld [vmem:[%s0 + $0x78] sm:$0xff]
  %v32 = vld [vmem:[%s0 + $0x80] sm:$0xff]
  %v33 = vld [vmem:[%s0 + $0x88] sm:$0xff]
  %v34 = vld [vmem:[%s0 + $0x90] sm:$0x33]
  %v35 = vld [vmem:[%s0 + $0x98] sm:$0x33]
  %v56 = vunpack.c.l.b16 %v16
  %v57 = vunpack.c.h.b16 %v16
  %v58 = vunpack.c.l.b16 %v17
  %v59 = vunpack.c.h.b16 %v17
  %v60 = vunpack.c.l.b16 %v18
  %v61 = vunpack.c.h.b16 %v18
  %v62 = vunpack.c.l.b16 %v19
  %v63 = vunpack.c.h.b16 %v19
  %v64 = vunpack.c.l.b16 %v20
  %v65 = vunpack.c.h.b16 %v20
  %v66 = vunpack.c.l.b16 %v21
  %v67 = vunpack.c.h.b16 %v21
  %v68 = vunpack.c.l.b16 %v22
  %v69 = vunpack.c.h.b16 %v22
  %v70 = vunpack.c.l.b16 %v23
  %v71 = vunpack.c.h.b16 %v23
  %v72 = vunpack.c.l.b16 %v24
  %v73 = vunpack.c.h.b16 %v24
  %v74 = vunpack.c.l.b16 %v25
  %v75 = vunpack.c.h.b16 %v25
  %v76 = vunpack.c.l.b16 %v26
  %v77 = vunpack.c.h.b16 %v26
  %v78 = vunpack.c.l.b16 %v27
  %v79 = vunpack.c.h.b16 %v27
  %v80 = vunpack.c.l.b16 %v28
  %v81 = vunpack.c.h.b16 %v28
  %v82 = vunpack.c.l.b16 %v29
  %v83 = vunpack.c.h.b16 %v29
  %v84 = vunpack.c.l.b16 %v30
  %v85 = vunpack.c.h.b16 %v30
  %v86 = vunpack.c.l.b16 %v31
  %v87 = vunpack.c.h.b16 %v31
  %v88 = vunpack.c.l.b16 %v32
  %v89 = vunpack.c.h.b16 %v32
  %v90 = vunpack.c.l.b16 %v33
  %v91 = vunpack.c.h.b16 %v33
  %v92 = vunpack.c.l.b16 %v34
  %v93 = vunpack.c.h.b16 %v34
  %v94 = vunpack.c.l.b16 %v35
  %v95 = vunpack.c.h.b16 %v35
  %v96 = vpack.c.b16 %v60, %v56
  %v97 = vpack.c.b16 %v61, %v57
  %v98 = vpack.c.b16 %v62, %v58
  %v99 = vpack.c.b16 %v63, %v59
  %v100 = vpack.c.b16 %v68, %v64
  %v101 = vpack.c.b16 %v69, %v65
  %v102 = vpack.c.b16 %v70, %v66
  %v103 = vpack.c.b16 %v71, %v67
  %v104 = vpack.c.b16 %v76, %v72
  %v105 = vpack.c.b16 %v77, %v73
  %v106 = vpack.c.b16 %v78, %v74
  %v107 = vpack.c.b16 %v79, %v75
  %v108 = vpack.c.b16 %v84, %v80
  %v109 = vpack.c.b16 %v85, %v81
  %v110 = vpack.c.b16 %v86, %v82
  %v111 = vpack.c.b16 %v87, %v83
  %v112 = vpack.c.b16 %v92, %v88
  %v113 = vpack.c.b16 %v93, %v89
  %v114 = vpack.c.b16 %v94, %v90
  %v115 = vpack.c.b16 %v95, %v91
  %vm132 = vcmask 613376
  %v134 = vsel %vm132, %v15, 0
  %vm136 = vcmask 1044480
  %vm137 = vcmask 1045504
  %v138 = vsel %vm136, 4294967295, 65535
  %v139 = vsel %vm137, %v138, 0
  %v141 = vand.u32 %v112, %v139
  %v144 = vand.u32 %v113, %v139
  %v147 = vand.u32 %v114, %v139
  %v150 = vand.u32 %v115, %v139
  %152 = vmatpush.bf16.msra.mxu0 0
  %153 = vmatpush.bf16.msra.mxu0 0
  %154 = vmatpush.bf16.msra.mxu0 0
  %155 = vmatpush.bf16.msra.mxu0 %v141
  %156 = vmatpush.bf16.msra.mxu0 %v108
  %157 = vmatpush.bf16.msra.mxu0 %v104
  %158 = vmatpush.bf16.msra.mxu0 %v100
  %159 = vmatpush.bf16.msra.mxu0 %v96
  %160 = vmatmul.bf16.gmra.mxu0 %v134
  %v161 = vpop.f32.mrf.mxu0
  %v162 = vadd.f32 0.0, %v161
  %v163 = vpop.f32.mrf.mxu0
  %164 = vdwg.mxu0
  %165 = vmatpush.bf16.msra.mxu0 0
  %166 = vmatpush.bf16.msra.mxu0 0
  %167 = vmatpush.bf16.msra.mxu0 0
  %168 = vmatpush.bf16.msra.mxu0 %v144
  %169 = vmatpush.bf16.msra.mxu0 %v109
  %170 = vmatpush.bf16.msra.mxu0 %v105
  %171 = vmatpush.bf16.msra.mxu0 %v101
  %172 = vmatpush.bf16.msra.mxu0 %v97
  %173 = vmatmul.bf16.gmra.mxu0 %v134
  %v174 = vpop.f32.mrf.mxu0
  %v175 = vadd.f32 0.0, %v174
  %v176 = vpop.f32.mrf.mxu0
  %177 = vdwg.mxu0
  %178 = vmatpush.bf16.msra.mxu0 0
  %179 = vmatpush.bf16.msra.mxu0 0
  %180 = vmatpush.bf16.msra.mxu0 0
  %181 = vmatpush.bf16.msra.mxu0 %v147
  %182 = vmatpush.bf16.msra.mxu0 %v110
  %183 = vmatpush.bf16.msra.mxu0 %v106
  %184 = vmatpush.bf16.msra.mxu0 %v102
  %185 = vmatpush.bf16.msra.mxu0 %v98
  %186 = vmatmul.bf16.gmra.mxu0 %v134
  %v187 = vpop.f32.mrf.mxu0
  %v188 = vadd.f32 0.0, %v187
  %v189 = vpop.f32.mrf.mxu0
  %190 = vdwg.mxu0
  %191 = vmatpush.bf16.msra.mxu0 0
  %192 = vmatpush.bf16.msra.mxu0 0
  %193 = vmatpush.bf16.msra.mxu0 0
  %194 = vmatpush.bf16.msra.mxu0 %v150
  %195 = vmatpush.bf16.msra.mxu0 %v111
  %196 = vmatpush.bf16.msra.mxu0 %v107
  %197 = vmatpush.bf16.msra.mxu0 %v103
  %198 = vmatpush.bf16.msra.mxu0 %v99
  %199 = vmatmul.bf16.gmra.mxu0 %v134
  %v200 = vpop.f32.mrf.mxu0
  %v201 = vadd.f32 0.0, %v200
  %v202 = vpop.f32.mrf.mxu0
  %203 = vdwg.mxu0
  %s204 = scalar_lea.vmem %s0, 160
  %v205 = vld [vmem:[%s204] sm:$0xff]
  %v206 = vld [vmem:[%s204 + $0x8] sm:$0xff]
  %v207 = vld [vmem:[%s204 + $0x10] sm:$0xff]
  %v208 = vld [vmem:[%s204 + $0x18] sm:$0xff]
  %v209 = vld [vmem:[%s204 + $0x20] sm:$0xff]
  %v210 = vld [vmem:[%s204 + $0x28] sm:$0xff]
  %v211 = vld [vmem:[%s204 + $0x30] sm:$0xff]
  %v212 = vld [vmem:[%s204 + $0x38] sm:$0xff]
  %v213 = vld [vmem:[%s204 + $0x40] sm:$0xff]
  %v214 = vld [vmem:[%s204 + $0x48] sm:$0xff]
  %v215 = vld [vmem:[%s204 + $0x50] sm:$0xff]
  %v216 = vld [vmem:[%s204 + $0x58] sm:$0xff]
  %v217 = vld [vmem:[%s204 + $0x60] sm:$0xff]
  %v218 = vld [vmem:[%s204 + $0x68] sm:$0xff]
  %v219 = vld [vmem:[%s204 + $0x70] sm:$0xff]
  %v220 = vld [vmem:[%s204 + $0x78] sm:$0xff]
  %v221 = vld [vmem:[%s204 + $0x80] sm:$0xff]
  %v222 = vld [vmem:[%s204 + $0x88] sm:$0xff]
  %v223 = vld [vmem:[%s204 + $0x90] sm:$0x33]
  %v224 = vld [vmem:[%s204 + $0x98] sm:$0x33]
  %v245 = vunpack.c.l.b16 %v205
  %v246 = vunpack.c.h.b16 %v205
  %v247 = vunpack.c.l.b16 %v206
  %v248 = vunpack.c.h.b16 %v206
  %v249 = vunpack.c.l.b16 %v207
  %v250 = vunpack.c.h.b16 %v207
  %v251 = vunpack.c.l.b16 %v208
  %v252 = vunpack.c.h.b16 %v208
  %v253 = vunpack.c.l.b16 %v209
  %v254 = vunpack.c.h.b16 %v209
  %v255 = vunpack.c.l.b16 %v210
  %v256 = vunpack.c.h.b16 %v210
  %v257 = vunpack.c.l.b16 %v211
  %v258 = vunpack.c.h.b16 %v211
  %v259 = vunpack.c.l.b16 %v212
  %v260 = vunpack.c.h.b16 %v212
  %v261 = vunpack.c.l.b16 %v213
  %v262 = vunpack.c.h.b16 %v213
  %v263 = vunpack.c.l.b16 %v214
  %v264 = vunpack.c.h.b16 %v214
  %v265 = vunpack.c.l.b16 %v215
  %v266 = vunpack.c.h.b16 %v215
  %v267 = vunpack.c.l.b16 %v216
  %v268 = vunpack.c.h.b16 %v216
  %v269 = vunpack.c.l.b16 %v217
  %v270 = vunpack.c.h.b16 %v217
  %v271 = vunpack.c.l.b16 %v218
  %v272 = vunpack.c.h.b16 %v218
  %v273 = vunpack.c.l.b16 %v219
  %v274 = vunpack.c.h.b16 %v219
  %v275 = vunpack.c.l.b16 %v220
  %v276 = vunpack.c.h.b16 %v220
  %v277 = vunpack.c.l.b16 %v221
  %v278 = vunpack.c.h.b16 %v221
  %v279 = vunpack.c.l.b16 %v222
  %v280 = vunpack.c.h.b16 %v222
  %v281 = vunpack.c.l.b16 %v223
  %v282 = vunpack.c.h.b16 %v223
  %v283 = vunpack.c.l.b16 %v224
  %v284 = vunpack.c.h.b16 %v224
  %v285 = vpack.c.b16 %v249, %v245
  %v286 = vpack.c.b16 %v250, %v246
  %v287 = vpack.c.b16 %v251, %v247
  %v288 = vpack.c.b16 %v252, %v248
  %v289 = vpack.c.b16 %v257, %v253
  %v290 = vpack.c.b16 %v258, %v254
  %v291 = vpack.c.b16 %v259, %v255
  %v292 = vpack.c.b16 %v260, %v256
  %v293 = vpack.c.b16 %v265, %v261
  %v294 = vpack.c.b16 %v266, %v262
  %v295 = vpack.c.b16 %v267, %v263
  %v296 = vpack.c.b16 %v268, %v264
  %v297 = vpack.c.b16 %v273, %v269
  %v298 = vpack.c.b16 %v274, %v270
  %v299 = vpack.c.b16 %v275, %v271
  %v300 = vpack.c.b16 %v276, %v272
  %v301 = vpack.c.b16 %v281, %v277
  %v302 = vpack.c.b16 %v282, %v278
  %v303 = vpack.c.b16 %v283, %v279
  %v304 = vpack.c.b16 %v284, %v280
  %v322 = vand.u32 %v301, %v139
  %v325 = vand.u32 %v302, %v139
  %v328 = vand.u32 %v303, %v139
  %v331 = vand.u32 %v304, %v139
  %333 = vmatpush.bf16.msra.mxu0 0
  %334 = vmatpush.bf16.msra.mxu0 0
  %335 = vmatpush.bf16.msra.mxu0 0
  %336 = vmatpush.bf16.msra.mxu0 %v322
  %337 = vmatpush.bf16.msra.mxu0 %v297
  %338 = vmatpush.bf16.msra.mxu0 %v293
  %339 = vmatpush.bf16.msra.mxu0 %v289
  %340 = vmatpush.bf16.msra.mxu0 %v285
  %341 = vmatmul.bf16.gmra.mxu0 %v134
  %v342 = vpop.f32.mrf.mxu0
  %v343 = vadd.f32 0.0, %v342
  %v344 = vpop.f32.mrf.mxu0
  %345 = vdwg.mxu0
  %346 = vmatpush.bf16.msra.mxu0 0
  %347 = vmatpush.bf16.msra.mxu0 0
  %348 = vmatpush.bf16.msra.mxu0 0
  %349 = vmatpush.bf16.msra.mxu0 %v325
  %350 = vmatpush.bf16.msra.mxu0 %v298
  %351 = vmatpush.bf16.msra.mxu0 %v294
  %352 = vmatpush.bf16.msra.mxu0 %v290
  %353 = vmatpush.bf16.msra.mxu0 %v286
  %354 = vmatmul.bf16.gmra.mxu0 %v134
  %v355 = vpop.f32.mrf.mxu0
  %v356 = vadd.f32 0.0, %v355
  %v357 = vpop.f32.mrf.mxu0
  %358 = vdwg.mxu0
  %359 = vmatpush.bf16.msra.mxu0 0
  %360 = vmatpush.bf16.msra.mxu0 0
  %361 = vmatpush.bf16.msra.mxu0 0
  %362 = vmatpush.bf16.msra.mxu0 %v328
  %363 = vmatpush.bf16.msra.mxu0 %v299
  %364 = vmatpush.bf16.msra.mxu0 %v295
  %365 = vmatpush.bf16.msra.mxu0 %v291
  %366 = vmatpush.bf16.msra.mxu0 %v287
  %367 = vmatmul.bf16.gmra.mxu0 %v134
  %v368 = vpop.f32.mrf.mxu0
  %v369 = vadd.f32 0.0, %v368
  %v370 = vpop.f32.mrf.mxu0
  %371 = vdwg.mxu0
  %372 = vmatpush.bf16.msra.mxu0 0
  %373 = vmatpush.bf16.msra.mxu0 0
  %374 = vmatpush.bf16.msra.mxu0 0
  %375 = vmatpush.bf16.msra.mxu0 %v331
  %376 = vmatpush.bf16.msra.mxu0 %v300
  %377 = vmatpush.bf16.msra.mxu0 %v296
  %378 = vmatpush.bf16.msra.mxu0 %v292
  %379 = vmatpush.bf16.msra.mxu0 %v288
  %380 = vmatmul.bf16.gmra.mxu0 %v134
  %v381 = vpop.f32.mrf.mxu0
  %v382 = vadd.f32 0.0, %v381
  %v383 = vpop.f32.mrf.mxu0
  %384 = vdwg.mxu0
  %s385 = scalar_lea.vmem %s0, 320
  %v386 = vld [vmem:[%s385] sm:$0xff]
  %v387 = vld [vmem:[%s385 + $0x8] sm:$0xff]
  %v388 = vld [vmem:[%s385 + $0x10] sm:$0xff]
  %v389 = vld [vmem:[%s385 + $0x18] sm:$0xff]
  %v390 = vld [vmem:[%s385 + $0x20] sm:$0xff]
  %v391 = vld [vmem:[%s385 + $0x28] sm:$0xff]
  %v392 = vld [vmem:[%s385 + $0x30] sm:$0xff]
  %v393 = vld [vmem:[%s385 + $0x38] sm:$0xff]
  %v394 = vld [vmem:[%s385 + $0x40] sm:$0xff]
  %v395 = vld [vmem:[%s385 + $0x48] sm:$0xff]
  %v396 = vld [vmem:[%s385 + $0x50] sm:$0xff]
  %v397 = vld [vmem:[%s385 + $0x58] sm:$0xff]
  %v398 = vld [vmem:[%s385 + $0x60] sm:$0xff]
  %v399 = vld [vmem:[%s385 + $0x68] sm:$0xff]
  %v400 = vld [vmem:[%s385 + $0x70] sm:$0xff]
  %v401 = vld [vmem:[%s385 + $0x78] sm:$0xff]
  %v402 = vld [vmem:[%s385 + $0x80] sm:$0xff]
  %v403 = vld [vmem:[%s385 + $0x88] sm:$0xff]
  %v404 = vld [vmem:[%s385 + $0x90] sm:$0x33]
  %v405 = vld [vmem:[%s385 + $0x98] sm:$0x33]
  %v426 = vunpack.c.l.b16 %v386
  %v427 = vunpack.c.h.b16 %v386
  %v428 = vunpack.c.l.b16 %v387
  %v429 = vunpack.c.h.b16 %v387
  %v430 = vunpack.c.l.b16 %v388
  %v431 = vunpack.c.h.b16 %v388
  %v432 = vunpack.c.l.b16 %v389
  %v433 = vunpack.c.h.b16 %v389
  %v434 = vunpack.c.l.b16 %v390
  %v435 = vunpack.c.h.b16 %v390
  %v436 = vunpack.c.l.b16 %v391
  %v437 = vunpack.c.h.b16 %v391
  %v438 = vunpack.c.l.b16 %v392
  %v439 = vunpack.c.h.b16 %v392
  %v440 = vunpack.c.l.b16 %v393
  %v441 = vunpack.c.h.b16 %v393
  %v442 = vunpack.c.l.b16 %v394
  %v443 = vunpack.c.h.b16 %v394
  %v444 = vunpack.c.l.b16 %v395
  %v445 = vunpack.c.h.b16 %v395
  %v446 = vunpack.c.l.b16 %v396
  %v447 = vunpack.c.h.b16 %v396
  %v448 = vunpack.c.l.b16 %v397
  %v449 = vunpack.c.h.b16 %v397
  %v450 = vunpack.c.l.b16 %v398
  %v451 = vunpack.c.h.b16 %v398
  %v452 = vunpack.c.l.b16 %v399
  %v453 = vunpack.c.h.b16 %v399
  %v454 = vunpack.c.l.b16 %v400
  %v455 = vunpack.c.h.b16 %v400
  %v456 = vunpack.c.l.b16 %v401
  %v457 = vunpack.c.h.b16 %v401
  %v458 = vunpack.c.l.b16 %v402
  %v459 = vunpack.c.h.b16 %v402
  %v460 = vunpack.c.l.b16 %v403
  %v461 = vunpack.c.h.b16 %v403
  %v462 = vunpack.c.l.b16 %v404
  %v463 = vunpack.c.h.b16 %v404
  %v464 = vunpack.c.l.b16 %v405
  %v465 = vunpack.c.h.b16 %v405
  %v466 = vpack.c.b16 %v430, %v426
  %v467 = vpack.c.b16 %v431, %v427
  %v468 = vpack.c.b16 %v432, %v428
  %v469 = vpack.c.b16 %v433, %v429
  %v470 = vpack.c.b16 %v438, %v434
  %v471 = vpack.c.b16 %v439, %v435
  %v472 = vpack.c.b16 %v440, %v436
  %v473 = vpack.c.b16 %v441, %v437
  %v474 = vpack.c.b16 %v446, %v442
  %v475 = vpack.c.b16 %v447, %v443
  %v476 = vpack.c.b16 %v448, %v444
  %v477 = vpack.c.b16 %v449, %v445
  %v478 = vpack.c.b16 %v454, %v450
  %v479 = vpack.c.b16 %v455, %v451
  %v480 = vpack.c.b16 %v456, %v452
  %v481 = vpack.c.b16 %v457, %v453
  %v482 = vpack.c.b16 %v462, %v458
  %v483 = vpack.c.b16 %v463, %v459
  %v484 = vpack.c.b16 %v464, %v460
  %v485 = vpack.c.b16 %v465, %v461
  %v503 = vand.u32 %v482, %v139
  %v506 = vand.u32 %v483, %v139
  %v509 = vand.u32 %v484, %v139
  %v512 = vand.u32 %v485, %v139
  %514 = vmatpush.bf16.msra.mxu0 0
  %515 = vmatpush.bf16.msra.mxu0 0
  %516 = vmatpush.bf16.msra.mxu0 0
  %517 = vmatpush.bf16.msra.mxu0 %v503
  %518 = vmatpush.bf16.msra.mxu0 %v478
  %519 = vmatpush.bf16.msra.mxu0 %v474
  %520 = vmatpush.bf16.msra.mxu0 %v470
  %521 = vmatpush.bf16.msra.mxu0 %v466
  %522 = vmatmul.bf16.gmra.mxu0 %v134
  %v523 = vpop.f32.mrf.mxu0
  %v524 = vadd.f32 0.0, %v523
  %v525 = vpop.f32.mrf.mxu0
  %526 = vdwg.mxu0
  %527 = vmatpush.bf16.msra.mxu0 0
  %528 = vmatpush.bf16.msra.mxu0 0
  %529 = vmatpush.bf16.msra.mxu0 0
  %530 = vmatpush.bf16.msra.mxu0 %v506
  %531 = vmatpush.bf16.msra.mxu0 %v479
  %532 = vmatpush.bf16.msra.mxu0 %v475
  %533 = vmatpush.bf16.msra.mxu0 %v471
  %534 = vmatpush.bf16.msra.mxu0 %v467
  %535 = vmatmul.bf16.gmra.mxu0 %v134
  %v536 = vpop.f32.mrf.mxu0
  %v537 = vadd.f32 0.0, %v536
  %v538 = vpop.f32.mrf.mxu0
  %539 = vdwg.mxu0
  %540 = vmatpush.bf16.msra.mxu0 0
  %541 = vmatpush.bf16.msra.mxu0 0
  %542 = vmatpush.bf16.msra.mxu0 0
  %543 = vmatpush.bf16.msra.mxu0 %v509
  %544 = vmatpush.bf16.msra.mxu0 %v480
  %545 = vmatpush.bf16.msra.mxu0 %v476
  %546 = vmatpush.bf16.msra.mxu0 %v472
  %547 = vmatpush.bf16.msra.mxu0 %v468
  %548 = vmatmul.bf16.gmra.mxu0 %v134
  %v549 = vpop.f32.mrf.mxu0
  %v550 = vadd.f32 0.0, %v549
  %v551 = vpop.f32.mrf.mxu0
  %552 = vdwg.mxu0
  %553 = vmatpush.bf16.msra.mxu0 0
  %554 = vmatpush.bf16.msra.mxu0 0
  %555 = vmatpush.bf16.msra.mxu0 0
  %556 = vmatpush.bf16.msra.mxu0 %v512
  %557 = vmatpush.bf16.msra.mxu0 %v481
  %558 = vmatpush.bf16.msra.mxu0 %v477
  %559 = vmatpush.bf16.msra.mxu0 %v473
  %560 = vmatpush.bf16.msra.mxu0 %v469
  %561 = vmatmul.bf16.gmra.mxu0 %v134
  %v562 = vpop.f32.mrf.mxu0
  %v563 = vadd.f32 0.0, %v562
  %v564 = vpop.f32.mrf.mxu0
  %565 = vdwg.mxu0
  %s566 = scalar_lea.vmem %s0, 480
  %v567 = vld [vmem:[%s566] sm:$0xff]
  %v568 = vld [vmem:[%s566 + $0x8] sm:$0xff]
  %v569 = vld [vmem:[%s566 + $0x10] sm:$0xff]
  %v570 = vld [vmem:[%s566 + $0x18] sm:$0xff]
  %v571 = vld [vmem:[%s566 + $0x20] sm:$0xff]
  %v572 = vld [vmem:[%s566 + $0x28] sm:$0xff]
  %v573 = vld [vmem:[%s566 + $0x30] sm:$0xff]
  %v574 = vld [vmem:[%s566 + $0x38] sm:$0xff]
  %v575 = vld [vmem:[%s566 + $0x40] sm:$0xff]
  %v576 = vld [vmem:[%s566 + $0x48] sm:$0xff]
  %v577 = vld [vmem:[%s566 + $0x50] sm:$0xff]
  %v578 = vld [vmem:[%s566 + $0x58] sm:$0xff]
  %v579 = vld [vmem:[%s566 + $0x60] sm:$0xff]
  %v580 = vld [vmem:[%s566 + $0x68] sm:$0xff]
  %v581 = vld [vmem:[%s566 + $0x70] sm:$0xff]
  %v582 = vld [vmem:[%s566 + $0x78] sm:$0xff]
  %v583 = vld [vmem:[%s566 + $0x80] sm:$0xff]
  %v584 = vld [vmem:[%s566 + $0x88] sm:$0xff]
  %v585 = vld [vmem:[%s566 + $0x90] sm:$0x33]
  %v586 = vld [vmem:[%s566 + $0x98] sm:$0x33]
  %v607 = vunpack.c.l.b16 %v567
  %v608 = vunpack.c.h.b16 %v567
  %v609 = vunpack.c.l.b16 %v568
  %v610 = vunpack.c.h.b16 %v568
  %v611 = vunpack.c.l.b16 %v569
  %v612 = vunpack.c.h.b16 %v569
  %v613 = vunpack.c.l.b16 %v570
  %v614 = vunpack.c.h.b16 %v570
  %v615 = vunpack.c.l.b16 %v571
  %v616 = vunpack.c.h.b16 %v571
  %v617 = vunpack.c.l.b16 %v572
  %v618 = vunpack.c.h.b16 %v572
  %v619 = vunpack.c.l.b16 %v573
  %v620 = vunpack.c.h.b16 %v573
  %v621 = vunpack.c.l.b16 %v574
  %v622 = vunpack.c.h.b16 %v574
  %v623 = vunpack.c.l.b16 %v575
  %v624 = vunpack.c.h.b16 %v575
  %v625 = vunpack.c.l.b16 %v576
  %v626 = vunpack.c.h.b16 %v576
  %v627 = vunpack.c.l.b16 %v577
  %v628 = vunpack.c.h.b16 %v577
  %v629 = vunpack.c.l.b16 %v578
  %v630 = vunpack.c.h.b16 %v578
  %v631 = vunpack.c.l.b16 %v579
  %v632 = vunpack.c.h.b16 %v579
  %v633 = vunpack.c.l.b16 %v580
  %v634 = vunpack.c.h.b16 %v580
  %v635 = vunpack.c.l.b16 %v581
  %v636 = vunpack.c.h.b16 %v581
  %v637 = vunpack.c.l.b16 %v582
  %v638 = vunpack.c.h.b16 %v582
  %v639 = vunpack.c.l.b16 %v583
  %v640 = vunpack.c.h.b16 %v583
  %v641 = vunpack.c.l.b16 %v584
  %v642 = vunpack.c.h.b16 %v584
  %v643 = vunpack.c.l.b16 %v585
  %v644 = vunpack.c.h.b16 %v585
  %v645 = vunpack.c.l.b16 %v586
  %v646 = vunpack.c.h.b16 %v586
  %v647 = vpack.c.b16 %v611, %v607
  %v648 = vpack.c.b16 %v612, %v608
  %v649 = vpack.c.b16 %v613, %v609
  %v650 = vpack.c.b16 %v614, %v610
  %v651 = vpack.c.b16 %v619, %v615
  %v652 = vpack.c.b16 %v620, %v616
  %v653 = vpack.c.b16 %v621, %v617
  %v654 = vpack.c.b16 %v622, %v618
  %v655 = vpack.c.b16 %v627, %v623
  %v656 = vpack.c.b16 %v628, %v624
  %v657 = vpack.c.b16 %v629, %v625
  %v658 = vpack.c.b16 %v630, %v626
  %v659 = vpack.c.b16 %v635, %v631
  %v660 = vpack.c.b16 %v636, %v632
  %v661 = vpack.c.b16 %v637, %v633
  %v662 = vpack.c.b16 %v638, %v634
  %v663 = vpack.c.b16 %v643, %v639
  %v664 = vpack.c.b16 %v644, %v640
  %v665 = vpack.c.b16 %v645, %v641
  %v666 = vpack.c.b16 %v646, %v642
  %v684 = vand.u32 %v663, %v139
  %v687 = vand.u32 %v664, %v139
  %v690 = vand.u32 %v665, %v139
  %v693 = vand.u32 %v666, %v139
  %695 = vmatpush.bf16.msra.mxu0 0
  %696 = vmatpush.bf16.msra.mxu0 0
  %697 = vmatpush.bf16.msra.mxu0 0
  %698 = vmatpush.bf16.msra.mxu0 %v684
  %699 = vmatpush.bf16.msra.mxu0 %v659
  %700 = vmatpush.bf16.msra.mxu0 %v655
  %701 = vmatpush.bf16.msra.mxu0 %v651
  %702 = vmatpush.bf16.msra.mxu0 %v647
  %703 = vmatmul.bf16.gmra.mxu0 %v134
  %v704 = vpop.f32.mrf.mxu0
  %v705 = vadd.f32 0.0, %v704
  %v706 = vpop.f32.mrf.mxu0
  %707 = vdwg.mxu0
  %708 = vmatpush.bf16.msra.mxu0 0
  %709 = vmatpush.bf16.msra.mxu0 0
  %710 = vmatpush.bf16.msra.mxu0 0
  %711 = vmatpush.bf16.msra.mxu0 %v687
  %712 = vmatpush.bf16.msra.mxu0 %v660
  %713 = vmatpush.bf16.msra.mxu0 %v656
  %714 = vmatpush.bf16.msra.mxu0 %v652
  %715 = vmatpush.bf16.msra.mxu0 %v648
  %716 = vmatmul.bf16.gmra.mxu0 %v134
  %v717 = vpop.f32.mrf.mxu0
  %v718 = vadd.f32 0.0, %v717
  %v719 = vpop.f32.mrf.mxu0
  %720 = vdwg.mxu0
  %721 = vmatpush.bf16.msra.mxu0 0
  %722 = vmatpush.bf16.msra.mxu0 0
  %723 = vmatpush.bf16.msra.mxu0 0
  %724 = vmatpush.bf16.msra.mxu0 %v690
  %725 = vmatpush.bf16.msra.mxu0 %v661
  %726 = vmatpush.bf16.msra.mxu0 %v657
  %727 = vmatpush.bf16.msra.mxu0 %v653
  %728 = vmatpush.bf16.msra.mxu0 %v649
  %729 = vmatmul.bf16.gmra.mxu0 %v134
  %v730 = vpop.f32.mrf.mxu0
  %v731 = vadd.f32 0.0, %v730
  %v732 = vpop.f32.mrf.mxu0
  %733 = vdwg.mxu0
  %734 = vmatpush.bf16.msra.mxu0 0
  %735 = vmatpush.bf16.msra.mxu0 0
  %736 = vmatpush.bf16.msra.mxu0 0
  %737 = vmatpush.bf16.msra.mxu0 %v693
  %738 = vmatpush.bf16.msra.mxu0 %v662
  %739 = vmatpush.bf16.msra.mxu0 %v658
  %740 = vmatpush.bf16.msra.mxu0 %v654
  %741 = vmatpush.bf16.msra.mxu0 %v650
  %742 = vmatmul.bf16.gmra.mxu0 %v134
  %v743 = vpop.f32.mrf.mxu0
  %v744 = vadd.f32 0.0, %v743
  %v745 = vpop.f32.mrf.mxu0
  %746 = vdwg.mxu0
  %v747 = vmax.f32 %v162, %v343
  %v748 = vmax.f32 %v175, %v356
  %v749 = vmax.f32 %v188, %v369
  %v750 = vmax.f32 %v201, %v382
  %v751 = vmax.f32 %v524, %v705
  %v752 = vmax.f32 %v537, %v718
  %v753 = vmax.f32 %v550, %v731
  %v754 = vmax.f32 %v563, %v744
  %v755 = vmax.f32 %v747, %v751
  %v756 = vmax.f32 %v748, %v752
  %v757 = vmax.f32 %v749, %v753
  %v758 = vmax.f32 %v750, %v754
  %v759 = vld [vmem:[%s2] sm:$0xff]
  %761 = vset.pattern.permute.xlu0 0
  %762 = vperm.xlu0 %761, %v759
  %v763 = vpop.permute.xlu0 %762
  %v765 = vadd.f32 %v755, %v763
  %v766 = vadd.f32 %v756, %v763
  %v767 = vadd.f32 %v757, %v763
  %v768 = vadd.f32 %v758, %v763
  %v769 = vmax.f32 %v765, 0.0
  %v770 = vmax.f32 %v766, 0.0
  %v771 = vmax.f32 %v767, 0.0
  %v772 = vmax.f32 %v768, 0.0
  %773 = vst [vmem:[%s3] sm:$0xff] %v769
  %774 = vst [vmem:[%s3 + $0x8] sm:$0xff] %v770
  %775 = vst [vmem:[%s3 + $0x10] sm:$0xff] %v771
  %776 = vst [vmem:[%s3 + $0x18] sm:$0xff] %v772
  // Predicated region
  $region14: #{net_forward.2} parent=0 // pred_check
    _
  $region15: #{net_forward.2} parent=0 // pred_check_branch
    %778 = sbr.rel (0) target = $region17
  $region16: #{net_forward.2} parent=0 // pred_region
    _
  $region17: #{net_forward.2} parent=0 // pred_fallthru
    _
  // Predicated region
  $region18: #{net_forward.2} parent=0 // pred_check
    _
  $region19: #{net_forward.2} parent=0 // pred_check_branch
    %780 = sbr.rel (0) target = $region21
  $region20: #{net_forward.2} parent=0 // pred_region
    _
  $region21: #{net_forward.2} parent=0 // pred_fallthru
    _

// kernel: net_forward.3
$region0: #{net_forward.3}
  #allocation0 [shape = 'u32[]', space=smem, size = 0x4, offset = 0x4, fixed_abs, tag = 'smem constant byte address 0x4 - core index']
  #allocation1 [shape = 'u32[72,128]{1,0:T(1,128)}', space=vmem, size = 0x9000, scoped, tag = 'internal scratch']
  #allocation2 [shape = 'f32[8,400]{1,0:T(8,128)}', space=vmem, size = 0x4000, scoped, tag = 'scratch operand']
  %s0 = inlined_call_operand.vmem [shape: bf16[1,800,150], index: 0, kind: input, shape index: {}]
  %s1 = inlined_call_operand.vmem [shape: bf16[150,16], index: 1, kind: input, shape index: {}]
  %s2 = inlined_call_operand.vmem [shape: f32[1,16], index: 2, kind: input, shape index: {}]
  %s3 = inlined_call_operand.vmem [shape: f32[400,120], index: 3, kind: input, shape index: {}]
  %s4 = inlined_call_operand.vmem [shape: f32[1,120], index: 4, kind: input, shape index: {}]
  %s5 = inlined_call_operand.vmem [shape: f32[120,84], index: 5, kind: input, shape index: {}]
  %s6 = inlined_call_operand.vmem [shape: f32[1,84], index: 6, kind: input, shape index: {}]
  %s7 = inlined_call_operand.vmem [shape: f32[84,10], index: 7, kind: input, shape index: {}]
  %s8 = inlined_call_operand.vmem [shape: f32[1,10], index: 8, kind: input, shape index: {}]
  %s9 = inlined_call_operand.vmem [shape: f32[8,10], index: 9, kind: output, shape index: {}]
  %s10 = sld [smem:[#allocation0]]
  $region46: #{net_forward.3} parent=0
    _
  %s12 = ssub.s32 1, %s10
  %s13 = scalar_select 0, %s12, %s10
  // Predicated region
  $region2: #{net_forward.3} parent=0 // pred_check
    _
  $region3: #{net_forward.3} parent=0 // pred_check_branch
    %15 = sbr.rel (0) target = $region5
  $region4: #{net_forward.3} parent=0 // pred_region
    _
  $region5: #{net_forward.3} parent=0 // pred_fallthru
    _
  // Predicated region
  $region6: #{net_forward.3} parent=0 // pred_check
    _
  $region7: #{net_forward.3} parent=0 // pred_check_branch
    %17 = sbr.rel (0) target = $region9
  $region8: #{net_forward.3} parent=0 // pred_region
    _
  $region9: #{net_forward.3} parent=0 // pred_fallthru
    _
  // Predicated region
  $region10: #{net_forward.3} parent=0 // pred_check
    _
  $region11: #{net_forward.3} parent=0 // pred_check_branch
    %19 = sbr.rel (0) target = $region13
  $region12: #{net_forward.3} parent=0 // pred_region
    _
  $region13: #{net_forward.3} parent=0 // pred_fallthru
    _
  // Predicated region
  $region14: #{net_forward.3} parent=0 // pred_check
    _
  $region15: #{net_forward.3} parent=0 // pred_check_branch
    %21 = sbr.rel (0) target = $region17
  $region16: #{net_forward.3} parent=0 // pred_region
    _
  $region17: #{net_forward.3} parent=0 // pred_fallthru
    _
  // Predicated region
  $region18: #{net_forward.3} parent=0 // pred_check
    _
  $region19: #{net_forward.3} parent=0 // pred_check_branch
    %23 = sbr.rel (0) target = $region21
  $region20: #{net_forward.3} parent=0 // pred_region
    _
  $region21: #{net_forward.3} parent=0 // pred_fallthru
    _
  // Predicated region
  $region22: #{net_forward.3} parent=0 // pred_check
    _
  $region23: #{net_forward.3} parent=0 // pred_check_branch
    %25 = sbr.rel (0) target = $region25
  $region24: #{net_forward.3} parent=0 // pred_region
    _
  $region25: #{net_forward.3} parent=0 // pred_fallthru
    _
  // Predicated region
  $region26: #{net_forward.3} parent=0 // pred_check
    _
  $region27: #{net_forward.3} parent=0 // pred_check_branch
    %27 = sbr.rel (0) target = $region29
  $region28: #{net_forward.3} parent=0 // pred_region
    _
  $region29: #{net_forward.3} parent=0 // pred_fallthru
    _
  // Predicated region
  $region30: #{net_forward.3} parent=0 // pred_check
    _
  $region31: #{net_forward.3} parent=0 // pred_check_branch
    %29 = sbr.rel (0) target = $region33
  $region32: #{net_forward.3} parent=0 // pred_region
    _
  $region33: #{net_forward.3} parent=0 // pred_fallthru
    _
  // Predicated region
  $region34: #{net_forward.3} parent=0 // pred_check
    _
  $region35: #{net_forward.3} parent=0 // pred_check_branch
    %31 = sbr.rel (0) target = $region37
  $region36: #{net_forward.3} parent=0 // pred_region
    _
  $region37: #{net_forward.3} parent=0 // pred_fallthru
    _
  %v33 = vld [vmem:[%s0] sm:$0xff]
  %v34 = vld [vmem:[%s0 + $0x8] sm:$0xff]
  %v35 = vld [vmem:[%s0 + $0x10] sm:$0xff]
  %v36 = vld [vmem:[%s0 + $0x18] sm:$0xff]
  %v37 = vld [vmem:[%s0 + $0x20] sm:$0xff]
  %v38 = vld [vmem:[%s0 + $0x28] sm:$0xff]
  %v39 = vld [vmem:[%s0 + $0x30] sm:$0xff]
  %v40 = vld [vmem:[%s0 + $0x38] sm:$0xff]
  %v41 = vld [vmem:[%s0 + $0x40] sm:$0xff]
  %v42 = vld [vmem:[%s0 + $0x48] sm:$0xff]
  %v43 = vld [vmem:[%s0 + $0x50] sm:$0xff]
  %v44 = vld [vmem:[%s0 + $0x58] sm:$0xff]
  %v45 = vld [vmem:[%s0 + $0x60] sm:$0xff]
  %v46 = vld [vmem:[%s0 + $0x68] sm:$0xff]
  %v47 = vld [vmem:[%s0 + $0x70] sm:$0xff]
  %v48 = vld [vmem:[%s0 + $0x78] sm:$0xff]
  %v49 = vld [vmem:[%s0 + $0x80] sm:$0xff]
  %v50 = vld [vmem:[%s0 + $0x88] sm:$0xff]
  %v51 = vld [vmem:[%s0 + $0x90] sm:$0xff]
  %v52 = vld [vmem:[%s0 + $0x98] sm:$0xff]
  %v53 = vld [vmem:[%s0 + $0xa0] sm:$0xff]
  %v54 = vld [vmem:[%s0 + $0xa8] sm:$0xff]
  %v55 = vld [vmem:[%s0 + $0xb0] sm:$0xff]
  %v56 = vld [vmem:[%s0 + $0xb8] sm:$0xff]
  %v57 = vld [vmem:[%s0 + $0xc0] sm:$0xff]
  %v58 = vld [vmem:[%s0 + $0xc8] sm:$0xff]
  %v59 = vld [vmem:[%s0 + $0xd0] sm:$0xff]
  %v60 = vld [vmem:[%s0 + $0xd8] sm:$0xff]
  %v61 = vld [vmem:[%s0 + $0xe0] sm:$0xff]
  %v62 = vld [vmem:[%s0 + $0xe8] sm:$0xff]
  %v63 = vld [vmem:[%s0 + $0xf0] sm:$0xff]
  %v64 = vld [vmem:[%s0 + $0xf8] sm:$0xff]
  %v65 = vld [vmem:[%s0 + $0x100] sm:$0xff]
  %v66 = vld [vmem:[%s0 + $0x108] sm:$0xff]
  %v67 = vld [vmem:[%s0 + $0x110] sm:$0xff]
  %v68 = vld [vmem:[%s0 + $0x118] sm:$0xff]
  %v69 = vld [vmem:[%s0 + $0x120] sm:$0xff]
  %v70 = vld [vmem:[%s0 + $0x128] sm:$0xff]
  %v71 = vld [vmem:[%s0 + $0x130] sm:$0xff]
  %v72 = vld [vmem:[%s0 + $0x138] sm:$0xff]
  %v73 = vld [vmem:[%s0 + $0x140] sm:$0xff]
  %v74 = vld [vmem:[%s0 + $0x148] sm:$0xff]
  %v75 = vld [vmem:[%s0 + $0x150] sm:$0xff]
  %v76 = vld [vmem:[%s0 + $0x158] sm:$0xff]
  %v77 = vld [vmem:[%s0 + $0x160] sm:$0xff]
  %v78 = vld [vmem:[%s0 + $0x168] sm:$0xff]
  %v79 = vld [vmem:[%s0 + $0x170] sm:$0xff]
  %v80 = vld [vmem:[%s0 + $0x178] sm:$0xff]
  %v81 = vld [vmem:[%s0 + $0x180] sm:$0xff]
  %v82 = vld [vmem:[%s0 + $0x188] sm:$0xff]
  %v83 = vld [vmem:[%s0 + $0x190] sm:$0xff]
  %v84 = vld [vmem:[%s0 + $0x198] sm:$0xff]
  %v85 = vld [vmem:[%s0 + $0x1a0] sm:$0xff]
  %v86 = vld [vmem:[%s0 + $0x1a8] sm:$0xff]
  %v87 = vld [vmem:[%s0 + $0x1b0] sm:$0xff]
  %v88 = vld [vmem:[%s0 + $0x1b8] sm:$0xff]
  %v89 = vld [vmem:[%s0 + $0x1c0] sm:$0xff]
  %v90 = vld [vmem:[%s0 + $0x1c8] sm:$0xff]
  %v91 = vld [vmem:[%s0 + $0x1d0] sm:$0xff]
  %v92 = vld [vmem:[%s0 + $0x1d8] sm:$0xff]
  %v93 = vld [vmem:[%s0 + $0x1e0] sm:$0xff]
  %v94 = vld [vmem:[%s0 + $0x1e8] sm:$0xff]
  %v95 = vld [vmem:[%s0 + $0x1f0] sm:$0xff]
  %v96 = vld [vmem:[%s0 + $0x1f8] sm:$0xff]
  %v97 = vld [vmem:[%s0 + $0x200] sm:$0xff]
  %v98 = vld [vmem:[%s0 + $0x208] sm:$0xff]
  %v99 = vld [vmem:[%s0 + $0x210] sm:$0xff]
  %v100 = vld [vmem:[%s0 + $0x218] sm:$0xff]
  %v101 = vld [vmem:[%s0 + $0x220] sm:$0xff]
  %v102 = vld [vmem:[%s0 + $0x228] sm:$0xff]
  %v103 = vld [vmem:[%s0 + $0x230] sm:$0xff]
  %v104 = vld [vmem:[%s0 + $0x238] sm:$0xff]
  %v105 = vld [vmem:[%s0 + $0x240] sm:$0xff]
  %v106 = vld [vmem:[%s0 + $0x248] sm:$0xff]
  %v107 = vld [vmem:[%s0 + $0x250] sm:$0xff]
  %v108 = vld [vmem:[%s0 + $0x258] sm:$0xff]
  %v109 = vld [vmem:[%s0 + $0x260] sm:$0xff]
  %v110 = vld [vmem:[%s0 + $0x268] sm:$0xff]
  %v111 = vld [vmem:[%s0 + $0x270] sm:$0xff]
  %v112 = vld [vmem:[%s0 + $0x278] sm:$0xff]
  %v113 = vld [vmem:[%s0 + $0x280] sm:$0xff]
  %v114 = vld [vmem:[%s0 + $0x288] sm:$0xff]
  %v115 = vld [vmem:[%s0 + $0x290] sm:$0xff]
  %v116 = vld [vmem:[%s0 + $0x298] sm:$0xff]
  %v117 = vld [vmem:[%s0 + $0x2a0] sm:$0xff]
  %v118 = vld [vmem:[%s0 + $0x2a8] sm:$0xff]
  %v119 = vld [vmem:[%s0 + $0x2b0] sm:$0xff]
  %v120 = vld [vmem:[%s0 + $0x2b8] sm:$0xff]
  %v121 = vld [vmem:[%s0 + $0x2c0] sm:$0xff]
  %v122 = vld [vmem:[%s0 + $0x2c8] sm:$0xff]
  %v123 = vld [vmem:[%s0 + $0x2d0] sm:$0xff]
  %v124 = vld [vmem:[%s0 + $0x2d8] sm:$0xff]
  %v125 = vld [vmem:[%s0 + $0x2e0] sm:$0xff]
  %v126 = vld [vmem:[%s0 + $0x2e8] sm:$0xff]
  %v127 = vld [vmem:[%s0 + $0x2f0] sm:$0xff]
  %v128 = vld [vmem:[%s0 + $0x2f8] sm:$0xff]
  %v129 = vld [vmem:[%s0 + $0x300] sm:$0xff]
  %v130 = vld [vmem:[%s0 + $0x308] sm:$0xff]
  %v131 = vld [vmem:[%s0 + $0x310] sm:$0xff]
  %v132 = vld [vmem:[%s0 + $0x318] sm:$0xff]
  %v133 = vld [vmem:[%s1] sm:$0xf]
  %v134 = vld [vmem:[%s1 + $0x4] sm:$0xf]
  %v135 = vld [vmem:[%s1 + $0x8] sm:$0xf]
  %v136 = vld [vmem:[%s1 + $0xc] sm:$0xf]
  %v137 = vld [vmem:[%s1 + $0x10] sm:$0xf]
  %v138 = vld [vmem:[%s1 + $0x14] sm:$0xf]
  %v139 = vld [vmem:[%s1 + $0x18] sm:$0xf]
  %v140 = vld [vmem:[%s1 + $0x1c] sm:$0xf]
  %v141 = vld [vmem:[%s1 + $0x20] sm:$0xf]
  %v142 = vld [vmem:[%s1 + $0x24] sm:$0xf]
  %v143 = vld [vmem:[%s1 + $0x28] sm:$0xf]
  %v144 = vld [vmem:[%s1 + $0x2c] sm:$0xf]
  %v145 = vld [vmem:[%s1 + $0x30] sm:$0xf]
  %v146 = vld [vmem:[%s1 + $0x34] sm:$0xf]
  %v147 = vld [vmem:[%s1 + $0x38] sm:$0xf]
  %v148 = vld [vmem:[%s1 + $0x3c] sm:$0xf]
  %v149 = vld [vmem:[%s1 + $0x40] sm:$0xf]
  %v150 = vld [vmem:[%s1 + $0x44] sm:$0xf]
  %v151 = vld [vmem:[%s1 + $0x48] sm:$0x7]
  %v252 = vunpack.c.l.b16 %v33
  %v253 = vunpack.c.h.b16 %v33
  %v254 = vunpack.c.l.b16 %v34
  %v255 = vunpack.c.h.b16 %v34
  %v256 = vunpack.c.l.b16 %v35
  %v257 = vunpack.c.h.b16 %v35
  %v258 = vunpack.c.l.b16 %v36
  %v259 = vunpack.c.h.b16 %v36
  %v260 = vunpack.c.l.b16 %v37
  %v261 = vunpack.c.h.b16 %v37
  %v262 = vunpack.c.l.b16 %v38
  %v263 = vunpack.c.h.b16 %v38
  %v264 = vunpack.c.l.b16 %v39
  %v265 = vunpack.c.h.b16 %v39
  %v266 = vunpack.c.l.b16 %v40
  %v267 = vunpack.c.h.b16 %v40
  %v268 = vunpack.c.l.b16 %v41
  %v269 = vunpack.c.h.b16 %v41
  %v270 = vunpack.c.l.b16 %v42
  %v271 = vunpack.c.h.b16 %v42
  %v272 = vunpack.c.l.b16 %v43
  %v273 = vunpack.c.h.b16 %v43
  %v274 = vunpack.c.l.b16 %v44
  %v275 = vunpack.c.h.b16 %v44
  %v276 = vunpack.c.l.b16 %v45
  %v277 = vunpack.c.h.b16 %v45
  %v278 = vunpack.c.l.b16 %v46
  %v279 = vunpack.c.h.b16 %v46
  %v280 = vunpack.c.l.b16 %v47
  %v281 = vunpack.c.h.b16 %v47
  %v282 = vunpack.c.l.b16 %v48
  %v283 = vunpack.c.h.b16 %v48
  %v284 = vunpack.c.l.b16 %v49
  %v285 = vunpack.c.h.b16 %v49
  %v286 = vunpack.c.l.b16 %v50
  %v287 = vunpack.c.h.b16 %v50
  %v288 = vunpack.c.l.b16 %v51
  %v289 = vunpack.c.h.b16 %v51
  %v290 = vunpack.c.l.b16 %v52
  %v291 = vunpack.c.h.b16 %v52
  %v292 = vunpack.c.l.b16 %v53
  %v293 = vunpack.c.h.b16 %v53
  %v294 = vunpack.c.l.b16 %v54
  %v295 = vunpack.c.h.b16 %v54
  %v296 = vunpack.c.l.b16 %v55
  %v297 = vunpack.c.h.b16 %v55
  %v298 = vunpack.c.l.b16 %v56
  %v299 = vunpack.c.h.b16 %v56
  %v300 = vunpack.c.l.b16 %v57
  %v301 = vunpack.c.h.b16 %v57
  %v302 = vunpack.c.l.b16 %v58
  %v303 = vunpack.c.h.b16 %v58
  %v304 = vunpack.c.l.b16 %v59
  %v305 = vunpack.c.h.b16 %v59
  %v306 = vunpack.c.l.b16 %v60
  %v307 = vunpack.c.h.b16 %v60
  %v308 = vunpack.c.l.b16 %v61
  %v309 = vunpack.c.h.b16 %v61
  %v310 = vunpack.c.l.b16 %v62
  %v311 = vunpack.c.h.b16 %v62
  %v312 = vunpack.c.l.b16 %v63
  %v313 = vunpack.c.h.b16 %v63
  %v314 = vunpack.c.l.b16 %v64
  %v315 = vunpack.c.h.b16 %v64
  %v316 = vunpack.c.l.b16 %v65
  %v317 = vunpack.c.h.b16 %v65
  %v318 = vunpack.c.l.b16 %v66
  %v319 = vunpack.c.h.b16 %v66
  %v320 = vunpack.c.l.b16 %v67
  %v321 = vunpack.c.h.b16 %v67
  %v322 = vunpack.c.l.b16 %v68
  %v323 = vunpack.c.h.b16 %v68
  %v324 = vunpack.c.l.b16 %v69
  %v325 = vunpack.c.h.b16 %v69
  %v326 = vunpack.c.l.b16 %v70
  %v327 = vunpack.c.h.b16 %v70
  %v328 = vunpack.c.l.b16 %v71
  %v329 = vunpack.c.h.b16 %v71
  %v330 = vunpack.c.l.b16 %v72
  %v331 = vunpack.c.h.b16 %v72
  %v332 = vunpack.c.l.b16 %v73
  %v333 = vunpack.c.h.b16 %v73
  %v334 = vunpack.c.l.b16 %v74
  %v335 = vunpack.c.h.b16 %v74
  %v336 = vunpack.c.l.b16 %v75
  %v337 = vunpack.c.h.b16 %v75
  %v338 = vunpack.c.l.b16 %v76
  %v339 = vunpack.c.h.b16 %v76
  %v340 = vunpack.c.l.b16 %v77
  %v341 = vunpack.c.h.b16 %v77
  %v342 = vunpack.c.l.b16 %v78
  %v343 = vunpack.c.h.b16 %v78
  %v344 = vunpack.c.l.b16 %v79
  %v345 = vunpack.c.h.b16 %v79
  %v346 = vunpack.c.l.b16 %v80
  %v347 = vunpack.c.h.b16 %v80
  %v348 = vunpack.c.l.b16 %v81
  %v349 = vunpack.c.h.b16 %v81
  %v350 = vunpack.c.l.b16 %v82
  %v351 = vunpack.c.h.b16 %v82
  %v352 = vunpack.c.l.b16 %v83
  %v353 = vunpack.c.h.b16 %v83
  %v354 = vunpack.c.l.b16 %v84
  %v355 = vunpack.c.h.b16 %v84
  %v356 = vunpack.c.l.b16 %v85
  %v357 = vunpack.c.h.b16 %v85
  %v358 = vunpack.c.l.b16 %v86
  %v359 = vunpack.c.h.b16 %v86
  %v360 = vunpack.c.l.b16 %v87
  %v361 = vunpack.c.h.b16 %v87
  %v362 = vunpack.c.l.b16 %v88
  %v363 = vunpack.c.h.b16 %v88
  %v364 = vunpack.c.l.b16 %v89
  %v365 = vunpack.c.h.b16 %v89
  %v366 = vunpack.c.l.b16 %v90
  %v367 = vunpack.c.h.b16 %v90
  %v368 = vunpack.c.l.b16 %v91
  %v369 = vunpack.c.h.b16 %v91
  %v370 = vunpack.c.l.b16 %v92
  %v371 = vunpack.c.h.b16 %v92
  %v372 = vunpack.c.l.b16 %v93
  %v373 = vunpack.c.h.b16 %v93
  %v374 = vunpack.c.l.b16 %v94
  %v375 = vunpack.c.h.b16 %v94
  %v376 = vunpack.c.l.b16 %v95
  %v377 = vunpack.c.h.b16 %v95
  %v378 = vunpack.c.l.b16 %v96
  %v379 = vunpack.c.h.b16 %v96
  %v380 = vunpack.c.l.b16 %v97
  %v381 = vunpack.c.h.b16 %v97
  %v382 = vunpack.c.l.b16 %v98
  %v383 = vunpack.c.h.b16 %v98
  %v384 = vunpack.c.l.b16 %v99
  %v385 = vunpack.c.h.b16 %v99
  %v386 = vunpack.c.l.b16 %v100
  %v387 = vunpack.c.h.b16 %v100
  %v388 = vunpack.c.l.b16 %v101
  %v389 = vunpack.c.h.b16 %v101
  %v390 = vunpack.c.l.b16 %v102
  %v391 = vunpack.c.h.b16 %v102
  %v392 = vunpack.c.l.b16 %v103
  %v393 = vunpack.c.h.b16 %v103
  %v394 = vunpack.c.l.b16 %v104
  %v395 = vunpack.c.h.b16 %v104
  %v396 = vunpack.c.l.b16 %v105
  %v397 = vunpack.c.h.b16 %v105
  %v398 = vunpack.c.l.b16 %v106
  %v399 = vunpack.c.h.b16 %v106
  %v400 = vunpack.c.l.b16 %v107
  %v401 = vunpack.c.h.b16 %v107
  %v402 = vunpack.c.l.b16 %v108
  %v403 = vunpack.c.h.b16 %v108
  %v404 = vunpack.c.l.b16 %v109
  %v405 = vunpack.c.h.b16 %v109
  %v406 = vunpack.c.l.b16 %v110
  %v407 = vunpack.c.h.b16 %v110
  %v408 = vunpack.c.l.b16 %v111
  %v409 = vunpack.c.h.b16 %v111
  %v410 = vunpack.c.l.b16 %v112
  %v411 = vunpack.c.h.b16 %v112
  %v412 = vunpack.c.l.b16 %v113
  %v413 = vunpack.c.h.b16 %v113
  %v414 = vunpack.c.l.b16 %v114
  %v415 = vunpack.c.h.b16 %v114
  %v416 = vunpack.c.l.b16 %v115
  %v417 = vunpack.c.h.b16 %v115
  %v418 = vunpack.c.l.b16 %v116
  %v419 = vunpack.c.h.b16 %v116
  %v420 = vunpack.c.l.b16 %v117
  %v421 = vunpack.c.h.b16 %v117
  %v422 = vunpack.c.l.b16 %v118
  %v423 = vunpack.c.h.b16 %v118
  %v424 = vunpack.c.l.b16 %v119
  %v425 = vunpack.c.h.b16 %v119
  %v426 = vunpack.c.l.b16 %v120
  %v427 = vunpack.c.h.b16 %v120
  %v428 = vunpack.c.l.b16 %v121
  %v429 = vunpack.c.h.b16 %v121
  %v430 = vunpack.c.l.b16 %v122
  %v431 = vunpack.c.h.b16 %v122
  %v432 = vunpack.c.l.b16 %v123
  %v433 = vunpack.c.h.b16 %v123
  %v434 = vunpack.c.l.b16 %v124
  %v435 = vunpack.c.h.b16 %v124
  %v436 = vunpack.c.l.b16 %v125
  %v437 = vunpack.c.h.b16 %v125
  %v438 = vunpack.c.l.b16 %v126
  %v439 = vunpack.c.h.b16 %v126
  %v440 = vunpack.c.l.b16 %v127
  %v441 = vunpack.c.h.b16 %v127
  %v442 = vunpack.c.l.b16 %v128
  %v443 = vunpack.c.h.b16 %v128
  %v444 = vunpack.c.l.b16 %v129
  %v445 = vunpack.c.h.b16 %v129
  %v446 = vunpack.c.l.b16 %v130
  %v447 = vunpack.c.h.b16 %v130
  %v448 = vunpack.c.l.b16 %v131
  %v449 = vunpack.c.h.b16 %v131
  %v450 = vunpack.c.l.b16 %v132
  %v451 = vunpack.c.h.b16 %v132
  %v452 = vpack.c.b16 %v254, %v252
  %v453 = vpack.c.b16 %v255, %v253
  %v454 = vpack.c.b16 %v258, %v256
  %v455 = vpack.c.b16 %v259, %v257
  %v456 = vpack.c.b16 %v262, %v260
  %v457 = vpack.c.b16 %v263, %v261
  %v458 = vpack.c.b16 %v266, %v264
  %v459 = vpack.c.b16 %v267, %v265
  %v460 = vpack.c.b16 %v270, %v268
  %v461 = vpack.c.b16 %v271, %v269
  %v462 = vpack.c.b16 %v274, %v272
  %v463 = vpack.c.b16 %v275, %v273
  %v464 = vpack.c.b16 %v278, %v276
  %v465 = vpack.c.b16 %v279, %v277
  %v466 = vpack.c.b16 %v282, %v280
  %v467 = vpack.c.b16 %v283, %v281
  %v468 = vpack.c.b16 %v286, %v284
  %v469 = vpack.c.b16 %v287, %v285
  %v470 = vpack.c.b16 %v290, %v288
  %v471 = vpack.c.b16 %v291, %v289
  %v472 = vpack.c.b16 %v294, %v292
  %v473 = vpack.c.b16 %v295, %v293
  %v474 = vpack.c.b16 %v298, %v296
  %v475 = vpack.c.b16 %v299, %v297
  %v476 = vpack.c.b16 %v302, %v300
  %v477 = vpack.c.b16 %v303, %v301
  %v478 = vpack.c.b16 %v306, %v304
  %v479 = vpack.c.b16 %v307, %v305
  %v480 = vpack.c.b16 %v310, %v308
  %v481 = vpack.c.b16 %v311, %v309
  %v482 = vpack.c.b16 %v314, %v312
  %v483 = vpack.c.b16 %v315, %v313
  %v484 = vpack.c.b16 %v318, %v316
  %v485 = vpack.c.b16 %v319, %v317
  %v486 = vpack.c.b16 %v322, %v320
  %v487 = vpack.c.b16 %v323, %v321
  %v488 = vpack.c.b16 %v326, %v324
  %v489 = vpack.c.b16 %v327, %v325
  %v490 = vpack.c.b16 %v330, %v328
  %v491 = vpack.c.b16 %v331, %v329
  %v492 = vpack.c.b16 %v334, %v332
  %v493 = vpack.c.b16 %v335, %v333
  %v494 = vpack.c.b16 %v338, %v336
  %v495 = vpack.c.b16 %v339, %v337
  %v496 = vpack.c.b16 %v342, %v340
  %v497 = vpack.c.b16 %v343, %v341
  %v498 = vpack.c.b16 %v346, %v344
  %v499 = vpack.c.b16 %v347, %v345
  %v500 = vpack.c.b16 %v350, %v348
  %v501 = vpack.c.b16 %v351, %v349
  %v502 = vpack.c.b16 %v354, %v352
  %v503 = vpack.c.b16 %v355, %v353
  %v504 = vpack.c.b16 %v358, %v356
  %v505 = vpack.c.b16 %v359, %v357
  %v506 = vpack.c.b16 %v362, %v360
  %v507 = vpack.c.b16 %v363, %v361
  %v508 = vpack.c.b16 %v366, %v364
  %v509 = vpack.c.b16 %v367, %v365
  %v510 = vpack.c.b16 %v370, %v368
  %v511 = vpack.c.b16 %v371, %v369
  %v512 = vpack.c.b16 %v374, %v372
  %v513 = vpack.c.b16 %v375, %v373
  %v514 = vpack.c.b16 %v378, %v376
  %v515 = vpack.c.b16 %v379, %v377
  %v516 = vpack.c.b16 %v382, %v380
  %v517 = vpack.c.b16 %v383, %v381
  %v518 = vpack.c.b16 %v386, %v384
  %v519 = vpack.c.b16 %v387, %v385
  %v520 = vpack.c.b16 %v390, %v388
  %v521 = vpack.c.b16 %v391, %v389
  %v522 = vpack.c.b16 %v394, %v392
  %v523 = vpack.c.b16 %v395, %v393
  %v524 = vpack.c.b16 %v398, %v396
  %v525 = vpack.c.b16 %v399, %v397
  %v526 = vpack.c.b16 %v402, %v400
  %v527 = vpack.c.b16 %v403, %v401
  %v528 = vpack.c.b16 %v406, %v404
  %v529 = vpack.c.b16 %v407, %v405
  %v530 = vpack.c.b16 %v410, %v408
  %v531 = vpack.c.b16 %v411, %v409
  %v532 = vpack.c.b16 %v414, %v412
  %v533 = vpack.c.b16 %v415, %v413
  %v534 = vpack.c.b16 %v418, %v416
  %v535 = vpack.c.b16 %v419, %v417
  %v536 = vpack.c.b16 %v422, %v420
  %v537 = vpack.c.b16 %v423, %v421
  %v538 = vpack.c.b16 %v426, %v424
  %v539 = vpack.c.b16 %v427, %v425
  %v540 = vpack.c.b16 %v430, %v428
  %v541 = vpack.c.b16 %v431, %v429
  %v542 = vpack.c.b16 %v434, %v432
  %v543 = vpack.c.b16 %v435, %v433
  %v544 = vpack.c.b16 %v438, %v436
  %v545 = vpack.c.b16 %v439, %v437
  %v546 = vpack.c.b16 %v442, %v440
  %v547 = vpack.c.b16 %v443, %v441
  %v548 = vpack.c.b16 %v446, %v444
  %v549 = vpack.c.b16 %v447, %v445
  %v550 = vpack.c.b16 %v450, %v448
  %v551 = vpack.c.b16 %v451, %v449
  %v621 = vunpack.c.l.b16 %v133
  %v622 = vunpack.c.l.b16 %v134
  %v623 = vunpack.c.l.b16 %v135
  %v624 = vunpack.c.l.b16 %v136
  %v625 = vunpack.c.l.b16 %v137
  %v626 = vunpack.c.l.b16 %v138
  %v627 = vunpack.c.l.b16 %v139
  %v628 = vunpack.c.l.b16 %v140
  %v629 = vunpack.c.l.b16 %v141
  %v630 = vunpack.c.l.b16 %v142
  %v631 = vunpack.c.l.b16 %v143
  %v632 = vunpack.c.l.b16 %v144
  %v633 = vunpack.c.l.b16 %v145
  %v634 = vunpack.c.l.b16 %v146
  %v635 = vunpack.c.l.b16 %v147
  %v636 = vunpack.c.l.b16 %v148
  %v637 = vunpack.c.l.b16 %v149
  %v638 = vunpack.c.l.b16 %v150
  %v639 = vunpack.c.l.b16 %v151
  %v640 = vpack.c.b16 %v622, %v621
  %v641 = vpack.c.b16 %v624, %v623
  %v642 = vpack.c.b16 %v626, %v625
  %v643 = vpack.c.b16 %v628, %v627
  %v644 = vpack.c.b16 %v630, %v629
  %v645 = vpack.c.b16 %v632, %v631
  %v646 = vpack.c.b16 %v634, %v633
  %v647 = vpack.c.b16 %v636, %v635
  %v648 = vpack.c.b16 %v638, %v637
  %v649 = vpack.c.b16 %v639, %v639
  %vm659 = vcmask 179200
  %v661 = vsel %vm659, %v453, 0
  %v664 = vsel %vm659, %v455, 0
  %v667 = vsel %vm659, %v457, 0
  %v670 = vsel %vm659, %v459, 0
  %v673 = vsel %vm659, %v461, 0
  %v676 = vsel %vm659, %v463, 0
  %v679 = vsel %vm659, %v465, 0
  %v682 = vsel %vm659, %v467, 0
  %v685 = vsel %vm659, %v469, 0
  %v688 = vsel %vm659, %v471, 0
  %v691 = vsel %vm659, %v473, 0
  %v694 = vsel %vm659, %v475, 0
  %v697 = vsel %vm659, %v477, 0
  %v700 = vsel %vm659, %v479, 0
  %v703 = vsel %vm659, %v481, 0
  %v706 = vsel %vm659, %v483, 0
  %v709 = vsel %vm659, %v485, 0
  %v712 = vsel %vm659, %v487, 0
  %v715 = vsel %vm659, %v489, 0
  %v718 = vsel %vm659, %v491, 0
  %v721 = vsel %vm659, %v493, 0
  %v724 = vsel %vm659, %v495, 0
  %v727 = vsel %vm659, %v497, 0
  %v730 = vsel %vm659, %v499, 0
  %v733 = vsel %vm659, %v501, 0
  %v736 = vsel %vm659, %v503, 0
  %v739 = vsel %vm659, %v505, 0
  %v742 = vsel %vm659, %v507, 0
  %v745 = vsel %vm659, %v509, 0
  %v748 = vsel %vm659, %v511, 0
  %v751 = vsel %vm659, %v513, 0
  %v754 = vsel %vm659, %v515, 0
  %v757 = vsel %vm659, %v517, 0
  %v760 = vsel %vm659, %v519, 0
  %v763 = vsel %vm659, %v521, 0
  %v766 = vsel %vm659, %v523, 0
  %v769 = vsel %vm659, %v525, 0
  %v772 = vsel %vm659, %v527, 0
  %v775 = vsel %vm659, %v529, 0
  %v778 = vsel %vm659, %v531, 0
  %v781 = vsel %vm659, %v533, 0
  %v784 = vsel %vm659, %v535, 0
  %v787 = vsel %vm659, %v537, 0
  %v790 = vsel %vm659, %v539, 0
  %v793 = vsel %vm659, %v541, 0
  %v796 = vsel %vm659, %v543, 0
  %v799 = vsel %vm659, %v545, 0
  %v802 = vsel %vm659, %v547, 0
  %v805 = vsel %vm659, %v549, 0
  %v808 = vsel %vm659, %v551, 0
  %vm810 = vcmask 1042432
  %v812 = vsel %vm810, %v649, 0
  %814 = vmatpush.bf16.msra.mxu0 %v647
  %815 = vmatpush.bf16.msra.mxu0 %v646
  %816 = vmatpush.bf16.msra.mxu0 %v645
  %817 = vmatpush.bf16.msra.mxu0 %v644
  %818 = vmatpush.bf16.msra.mxu0 %v643
  %819 = vmatpush.bf16.msra.mxu0 %v642
  %820 = vmatpush.bf16.msra.mxu0 %v641
  %821 = vmatpush.bf16.msra.mxu0 %v640
  %822 = vmatmul.bf16.gmra.mxu0 %v452
  %v823 = vpop.f32.mrf.mxu0
  %v824 = vadd.f32 0.0, %v823
  %v825 = vpop.f32.mrf.mxu0
  %v826 = vadd.f32 0.0, %v825
  %827 = vmatmul.bf16.gmra.mxu0 %v454
  %v828 = vpop.f32.mrf.mxu0
  %v829 = vadd.f32 0.0, %v828
  %v830 = vpop.f32.mrf.mxu0
  %v831 = vadd.f32 0.0, %v830
  %832 = vmatmul.bf16.gmra.mxu0 %v456
  %v833 = vpop.f32.mrf.mxu0
  %v834 = vadd.f32 0.0, %v833
  %v835 = vpop.f32.mrf.mxu0
  %v836 = vadd.f32 0.0, %v835
  %837 = vmatmul.bf16.gmra.mxu0 %v458
  %v838 = vpop.f32.mrf.mxu0
  %v839 = vadd.f32 0.0, %v838
  %v840 = vpop.f32.mrf.mxu0
  %v841 = vadd.f32 0.0, %v840
  %842 = vmatmul.bf16.gmra.mxu0 %v460
  %v843 = vpop.f32.mrf.mxu0
  %v844 = vadd.f32 0.0, %v843
  %v845 = vpop.f32.mrf.mxu0
  %v846 = vadd.f32 0.0, %v845
  %847 = vmatmul.bf16.gmra.mxu0 %v462
  %v848 = vpop.f32.mrf.mxu0
  %v849 = vadd.f32 0.0, %v848
  %v850 = vpop.f32.mrf.mxu0
  %v851 = vadd.f32 0.0, %v850
  %852 = vmatmul.bf16.gmra.mxu0 %v464
  %v853 = vpop.f32.mrf.mxu0
  %v854 = vadd.f32 0.0, %v853
  %v855 = vpop.f32.mrf.mxu0
  %v856 = vadd.f32 0.0, %v855
  %857 = vmatmul.bf16.gmra.mxu0 %v466
  %v858 = vpop.f32.mrf.mxu0
  %v859 = vadd.f32 0.0, %v858
  %v860 = vpop.f32.mrf.mxu0
  %v861 = vadd.f32 0.0, %v860
  %862 = vmatmul.bf16.gmra.mxu0 %v468
  %v863 = vpop.f32.mrf.mxu0
  %v864 = vadd.f32 0.0, %v863
  %v865 = vpop.f32.mrf.mxu0
  %v866 = vadd.f32 0.0, %v865
  %867 = vmatmul.bf16.gmra.mxu0 %v470
  %v868 = vpop.f32.mrf.mxu0
  %v869 = vadd.f32 0.0, %v868
  %v870 = vpop.f32.mrf.mxu0
  %v871 = vadd.f32 0.0, %v870
  %872 = vmatmul.bf16.gmra.mxu0 %v472
  %v873 = vpop.f32.mrf.mxu0
  %v874 = vadd.f32 0.0, %v873
  %v875 = vpop.f32.mrf.mxu0
  %v876 = vadd.f32 0.0, %v875
  %877 = vmatmul.bf16.gmra.mxu0 %v474
  %v878 = vpop.f32.mrf.mxu0
  %v879 = vadd.f32 0.0, %v878
  %v880 = vpop.f32.mrf.mxu0
  %v881 = vadd.f32 0.0, %v880
  %882 = vmatmul.bf16.gmra.mxu0 %v476
  %v883 = vpop.f32.mrf.mxu0
  %v884 = vadd.f32 0.0, %v883
  %v885 = vpop.f32.mrf.mxu0
  %v886 = vadd.f32 0.0, %v885
  %887 = vmatmul.bf16.gmra.mxu0 %v478
  %v888 = vpop.f32.mrf.mxu0
  %v889 = vadd.f32 0.0, %v888
  %v890 = vpop.f32.mrf.mxu0
  %v891 = vadd.f32 0.0, %v890
  %892 = vmatmul.bf16.gmra.mxu0 %v480
  %v893 = vpop.f32.mrf.mxu0
  %v894 = vadd.f32 0.0, %v893
  %v895 = vpop.f32.mrf.mxu0
  %v896 = vadd.f32 0.0, %v895
  %897 = vmatmul.bf16.gmra.mxu0 %v482
  %v898 = vpop.f32.mrf.mxu0
  %v899 = vadd.f32 0.0, %v898
  %v900 = vpop.f32.mrf.mxu0
  %v901 = vadd.f32 0.0, %v900
  %902 = vmatmul.bf16.gmra.mxu0 %v484
  %v903 = vpop.f32.mrf.mxu0
  %v904 = vadd.f32 0.0, %v903
  %v905 = vpop.f32.mrf.mxu0
  %v906 = vadd.f32 0.0, %v905
  %907 = vmatmul.bf16.gmra.mxu0 %v486
  %v908 = vpop.f32.mrf.mxu0
  %v909 = vadd.f32 0.0, %v908
  %v910 = vpop.f32.mrf.mxu0
  %v911 = vadd.f32 0.0, %v910
  %912 = vmatmul.bf16.gmra.mxu0 %v488
  %v913 = vpop.f32.mrf.mxu0
  %v914 = vadd.f32 0.0, %v913
  %v915 = vpop.f32.mrf.mxu0
  %v916 = vadd.f32 0.0, %v915
  %917 = vmatmul.bf16.gmra.mxu0 %v490
  %v918 = vpop.f32.mrf.mxu0
  %v919 = vadd.f32 0.0, %v918
  %v920 = vpop.f32.mrf.mxu0
  %v921 = vadd.f32 0.0, %v920
  %922 = vmatmul.bf16.gmra.mxu0 %v492
  %v923 = vpop.f32.mrf.mxu0
  %v924 = vadd.f32 0.0, %v923
  %v925 = vpop.f32.mrf.mxu0
  %v926 = vadd.f32 0.0, %v925
  %927 = vmatmul.bf16.gmra.mxu0 %v494
  %v928 = vpop.f32.mrf.mxu0
  %v929 = vadd.f32 0.0, %v928
  %v930 = vpop.f32.mrf.mxu0
  %v931 = vadd.f32 0.0, %v930
  %932 = vmatmul.bf16.gmra.mxu0 %v496
  %v933 = vpop.f32.mrf.mxu0
  %v934 = vadd.f32 0.0, %v933
  %v935 = vpop.f32.mrf.mxu0
  %v936 = vadd.f32 0.0, %v935
  %937 = vmatmul.bf16.gmra.mxu0 %v498
  %v938 = vpop.f32.mrf.mxu0
  %v939 = vadd.f32 0.0, %v938
  %v940 = vpop.f32.mrf.mxu0
  %v941 = vadd.f32 0.0, %v940
  %942 = vmatmul.bf16.gmra.mxu0 %v500
  %v943 = vpop.f32.mrf.mxu0
  %v944 = vadd.f32 0.0, %v943
  %v945 = vpop.f32.mrf.mxu0
  %v946 = vadd.f32 0.0, %v945
  %947 = vmatmul.bf16.gmra.mxu0 %v502
  %v948 = vpop.f32.mrf.mxu0
  %v949 = vadd.f32 0.0, %v948
  %v950 = vpop.f32.mrf.mxu0
  %v951 = vadd.f32 0.0, %v950
  %952 = vmatmul.bf16.gmra.mxu0 %v504
  %v953 = vpop.f32.mrf.mxu0
  %v954 = vadd.f32 0.0, %v953
  %v955 = vpop.f32.mrf.mxu0
  %v956 = vadd.f32 0.0, %v955
  %957 = vmatmul.bf16.gmra.mxu0 %v506
  %v958 = vpop.f32.mrf.mxu0
  %v959 = vadd.f32 0.0, %v958
  %v960 = vpop.f32.mrf.mxu0
  %v961 = vadd.f32 0.0, %v960
  %962 = vmatmul.bf16.gmra.mxu0 %v508
  %v963 = vpop.f32.mrf.mxu0
  %v964 = vadd.f32 0.0, %v963
  %v965 = vpop.f32.mrf.mxu0
  %v966 = vadd.f32 0.0, %v965
  %967 = vmatmul.bf16.gmra.mxu0 %v510
  %v968 = vpop.f32.mrf.mxu0
  %v969 = vadd.f32 0.0, %v968
  %v970 = vpop.f32.mrf.mxu0
  %v971 = vadd.f32 0.0, %v970
  %972 = vmatmul.bf16.gmra.mxu0 %v512
  %v973 = vpop.f32.mrf.mxu0
  %v974 = vadd.f32 0.0, %v973
  %v975 = vpop.f32.mrf.mxu0
  %v976 = vadd.f32 0.0, %v975
  %977 = vmatmul.bf16.gmra.mxu0 %v514
  %v978 = vpop.f32.mrf.mxu0
  %v979 = vadd.f32 0.0, %v978
  %v980 = vpop.f32.mrf.mxu0
  %v981 = vadd.f32 0.0, %v980
  %982 = vmatmul.bf16.gmra.mxu0 %v516
  %v983 = vpop.f32.mrf.mxu0
  %v984 = vadd.f32 0.0, %v983
  %v985 = vpop.f32.mrf.mxu0
  %v986 = vadd.f32 0.0, %v985
  %987 = vmatmul.bf16.gmra.mxu0 %v518
  %v988 = vpop.f32.mrf.mxu0
  %v989 = vadd.f32 0.0, %v988
  %v990 = vpop.f32.mrf.mxu0
  %v991 = vadd.f32 0.0, %v990
  %992 = vmatmul.bf16.gmra.mxu0 %v520
  %v993 = vpop.f32.mrf.mxu0
  %v994 = vadd.f32 0.0, %v993
  %v995 = vpop.f32.mrf.mxu0
  %v996 = vadd.f32 0.0, %v995
  %997 = vmatmul.bf16.gmra.mxu0 %v522
  %v998 = vpop.f32.mrf.mxu0
  %v999 = vadd.f32 0.0, %v998
  %v1000 = vpop.f32.mrf.mxu0
  %v1001 = vadd.f32 0.0, %v1000
  %1002 = vmatmul.bf16.gmra.mxu0 %v524
  %v1003 = vpop.f32.mrf.mxu0
  %v1004 = vadd.f32 0.0, %v1003
  %v1005 = vpop.f32.mrf.mxu0
  %v1006 = vadd.f32 0.0, %v1005
  %1007 = vmatmul.bf16.gmra.mxu0 %v526
  %v1008 = vpop.f32.mrf.mxu0
  %v1009 = vadd.f32 0.0, %v1008
  %v1010 = vpop.f32.mrf.mxu0
  %v1011 = vadd.f32 0.0, %v1010
  %1012 = vmatmul.bf16.gmra.mxu0 %v528
  %v1013 = vpop.f32.mrf.mxu0
  %v1014 = vadd.f32 0.0, %v1013
  %v1015 = vpop.f32.mrf.mxu0
  %v1016 = vadd.f32 0.0, %v1015
  %1017 = vmatmul.bf16.gmra.mxu0 %v530
  %v1018 = vpop.f32.mrf.mxu0
  %v1019 = vadd.f32 0.0, %v1018
  %v1020 = vpop.f32.mrf.mxu0
  %v1021 = vadd.f32 0.0, %v1020
  %1022 = vmatmul.bf16.gmra.mxu0 %v532
  %v1023 = vpop.f32.mrf.mxu0
  %v1024 = vadd.f32 0.0, %v1023
  %v1025 = vpop.f32.mrf.mxu0
  %v1026 = vadd.f32 0.0, %v1025
  %1027 = vmatmul.bf16.gmra.mxu0 %v534
  %v1028 = vpop.f32.mrf.mxu0
  %v1029 = vadd.f32 0.0, %v1028
  %v1030 = vpop.f32.mrf.mxu0
  %v1031 = vadd.f32 0.0, %v1030
  %1032 = vmatmul.bf16.gmra.mxu0 %v536
  %v1033 = vpop.f32.mrf.mxu0
  %v1034 = vadd.f32 0.0, %v1033
  %v1035 = vpop.f32.mrf.mxu0
  %v1036 = vadd.f32 0.0, %v1035
  %1037 = vmatmul.bf16.gmra.mxu0 %v538
  %v1038 = vpop.f32.mrf.mxu0
  %v1039 = vadd.f32 0.0, %v1038
  %v1040 = vpop.f32.mrf.mxu0
  %v1041 = vadd.f32 0.0, %v1040
  %1042 = vmatmul.bf16.gmra.mxu0 %v540
  %v1043 = vpop.f32.mrf.mxu0
  %v1044 = vadd.f32 0.0, %v1043
  %v1045 = vpop.f32.mrf.mxu0
  %v1046 = vadd.f32 0.0, %v1045
  %1047 = vmatmul.bf16.gmra.mxu0 %v542
  %v1048 = vpop.f32.mrf.mxu0
  %v1049 = vadd.f32 0.0, %v1048
  %v1050 = vpop.f32.mrf.mxu0
  %v1051 = vadd.f32 0.0, %v1050
  %1052 = vmatmul.bf16.gmra.mxu0 %v544
  %v1053 = vpop.f32.mrf.mxu0
  %v1054 = vadd.f32 0.0, %v1053
  %v1055 = vpop.f32.mrf.mxu0
  %v1056 = vadd.f32 0.0, %v1055
  %1057 = vmatmul.bf16.gmra.mxu0 %v546
  %v1058 = vpop.f32.mrf.mxu0
  %v1059 = vadd.f32 0.0, %v1058
  %v1060 = vpop.f32.mrf.mxu0
  %v1061 = vadd.f32 0.0, %v1060
  %1062 = vmatmul.bf16.gmra.mxu0 %v548
  %v1063 = vpop.f32.mrf.mxu0
  %v1064 = vadd.f32 0.0, %v1063
  %v1065 = vpop.f32.mrf.mxu0
  %v1066 = vadd.f32 0.0, %v1065
  %1067 = vmatmul.bf16.gmra.mxu0 %v550
  %v1068 = vpop.f32.mrf.mxu0
  %v1069 = vadd.f32 0.0, %v1068
  %v1070 = vpop.f32.mrf.mxu0
  %v1071 = vadd.f32 0.0, %v1070
  %1072 = vdwg.mxu0
  %1073 = vmatpush.bf16.msra.mxu0 0
  %1074 = vmatpush.bf16.msra.mxu0 0
  %1075 = vmatpush.bf16.msra.mxu0 0
  %1076 = vmatpush.bf16.msra.mxu0 0
  %1077 = vmatpush.bf16.msra.mxu0 0
  %1078 = vmatpush.bf16.msra.mxu0 0
  %1079 = vmatpush.bf16.msra.mxu0 %v812
  %1080 = vmatpush.bf16.msra.mxu0 %v648
  %1081 = vmatmul.bf16.gmra.mxu0 %v661
  %v1082 = vpop.f32.mrf.mxu0
  %v1083 = vadd.f32 %v824, %v1082
  %v1084 = vpop.f32.mrf.mxu0
  %v1085 = vadd.f32 %v826, %v1084
  %1086 = vmatmul.bf16.gmra.mxu0 %v664
  %v1087 = vpop.f32.mrf.mxu0
  %v1088 = vadd.f32 %v829, %v1087
  %v1089 = vpop.f32.mrf.mxu0
  %v1090 = vadd.f32 %v831, %v1089
  %1091 = vmatmul.bf16.gmra.mxu0 %v667
  %v1092 = vpop.f32.mrf.mxu0
  %v1093 = vadd.f32 %v834, %v1092
  %v1094 = vpop.f32.mrf.mxu0
  %v1095 = vadd.f32 %v836, %v1094
  %1096 = vmatmul.bf16.gmra.mxu0 %v670
  %v1097 = vpop.f32.mrf.mxu0
  %v1098 = vadd.f32 %v839, %v1097
  %v1099 = vpop.f32.mrf.mxu0
  %v1100 = vadd.f32 %v841, %v1099
  %1101 = vmatmul.bf16.gmra.mxu0 %v673
  %v1102 = vpop.f32.mrf.mxu0
  %v1103 = vadd.f32 %v844, %v1102
  %v1104 = vpop.f32.mrf.mxu0
  %v1105 = vadd.f32 %v846, %v1104
  %1106 = vmatmul.bf16.gmra.mxu0 %v676
  %v1107 = vpop.f32.mrf.mxu0
  %v1108 = vadd.f32 %v849, %v1107
  %v1109 = vpop.f32.mrf.mxu0
  %v1110 = vadd.f32 %v851, %v1109
  %1111 = vmatmul.bf16.gmra.mxu0 %v679
  %v1112 = vpop.f32.mrf.mxu0
  %v1113 = vadd.f32 %v854, %v1112
  %v1114 = vpop.f32.mrf.mxu0
  %v1115 = vadd.f32 %v856, %v1114
  %1116 = vmatmul.bf16.gmra.mxu0 %v682
  %v1117 = vpop.f32.mrf.mxu0
  %v1118 = vadd.f32 %v859, %v1117
  %v1119 = vpop.f32.mrf.mxu0
  %v1120 = vadd.f32 %v861, %v1119
  %1121 = vmatmul.bf16.gmra.mxu0 %v685
  %v1122 = vpop.f32.mrf.mxu0
  %v1123 = vadd.f32 %v864, %v1122
  %v1124 = vpop.f32.mrf.mxu0
  %v1125 = vadd.f32 %v866, %v1124
  %1126 = vmatmul.bf16.gmra.mxu0 %v688
  %v1127 = vpop.f32.mrf.mxu0
  %v1128 = vadd.f32 %v869, %v1127
  %v1129 = vpop.f32.mrf.mxu0
  %v1130 = vadd.f32 %v871, %v1129
  %1131 = vmatmul.bf16.gmra.mxu0 %v691
  %v1132 = vpop.f32.mrf.mxu0
  %v1133 = vadd.f32 %v874, %v1132
  %v1134 = vpop.f32.mrf.mxu0
  %v1135 = vadd.f32 %v876, %v1134
  %1136 = vmatmul.bf16.gmra.mxu0 %v694
  %v1137 = vpop.f32.mrf.mxu0
  %v1138 = vadd.f32 %v879, %v1137
  %v1139 = vpop.f32.mrf.mxu0
  %v1140 = vadd.f32 %v881, %v1139
  %1141 = vmatmul.bf16.gmra.mxu0 %v697
  %v1142 = vpop.f32.mrf.mxu0
  %v1143 = vadd.f32 %v884, %v1142
  %v1144 = vpop.f32.mrf.mxu0
  %v1145 = vadd.f32 %v886, %v1144
  %1146 = vmatmul.bf16.gmra.mxu0 %v700
  %v1147 = vpop.f32.mrf.mxu0
  %v1148 = vadd.f32 %v889, %v1147
  %v1149 = vpop.f32.mrf.mxu0
  %v1150 = vadd.f32 %v891, %v1149
  %1151 = vmatmul.bf16.gmra.mxu0 %v703
  %v1152 = vpop.f32.mrf.mxu0
  %v1153 = vadd.f32 %v894, %v1152
  %v1154 = vpop.f32.mrf.mxu0
  %v1155 = vadd.f32 %v896, %v1154
  %1156 = vmatmul.bf16.gmra.mxu0 %v706
  %v1157 = vpop.f32.mrf.mxu0
  %v1158 = vadd.f32 %v899, %v1157
  %v1159 = vpop.f32.mrf.mxu0
  %v1160 = vadd.f32 %v901, %v1159
  %1161 = vmatmul.bf16.gmra.mxu0 %v709
  %v1162 = vpop.f32.mrf.mxu0
  %v1163 = vadd.f32 %v904, %v1162
  %v1164 = vpop.f32.mrf.mxu0
  %v1165 = vadd.f32 %v906, %v1164
  %1166 = vmatmul.bf16.gmra.mxu0 %v712
  %v1167 = vpop.f32.mrf.mxu0
  %v1168 = vadd.f32 %v909, %v1167
  %v1169 = vpop.f32.mrf.mxu0
  %v1170 = vadd.f32 %v911, %v1169
  %1171 = vmatmul.bf16.gmra.mxu0 %v715
  %v1172 = vpop.f32.mrf.mxu0
  %v1173 = vadd.f32 %v914, %v1172
  %v1174 = vpop.f32.mrf.mxu0
  %v1175 = vadd.f32 %v916, %v1174
  %1176 = vmatmul.bf16.gmra.mxu0 %v718
  %v1177 = vpop.f32.mrf.mxu0
  %v1178 = vadd.f32 %v919, %v1177
  %v1179 = vpop.f32.mrf.mxu0
  %v1180 = vadd.f32 %v921, %v1179
  %1181 = vmatmul.bf16.gmra.mxu0 %v721
  %v1182 = vpop.f32.mrf.mxu0
  %v1183 = vadd.f32 %v924, %v1182
  %v1184 = vpop.f32.mrf.mxu0
  %v1185 = vadd.f32 %v926, %v1184
  %1186 = vmatmul.bf16.gmra.mxu0 %v724
  %v1187 = vpop.f32.mrf.mxu0
  %v1188 = vadd.f32 %v929, %v1187
  %v1189 = vpop.f32.mrf.mxu0
  %v1190 = vadd.f32 %v931, %v1189
  %1191 = vmatmul.bf16.gmra.mxu0 %v727
  %v1192 = vpop.f32.mrf.mxu0
  %v1193 = vadd.f32 %v934, %v1192
  %v1194 = vpop.f32.mrf.mxu0
  %v1195 = vadd.f32 %v936, %v1194
  %1196 = vmatmul.bf16.gmra.mxu0 %v730
  %v1197 = vpop.f32.mrf.mxu0
  %v1198 = vadd.f32 %v939, %v1197
  %v1199 = vpop.f32.mrf.mxu0
  %v1200 = vadd.f32 %v941, %v1199
  %1201 = vmatmul.bf16.gmra.mxu0 %v733
  %v1202 = vpop.f32.mrf.mxu0
  %v1203 = vadd.f32 %v944, %v1202
  %v1204 = vpop.f32.mrf.mxu0
  %v1205 = vadd.f32 %v946, %v1204
  %1206 = vmatmul.bf16.gmra.mxu0 %v736
  %v1207 = vpop.f32.mrf.mxu0
  %v1208 = vadd.f32 %v949, %v1207
  %v1209 = vpop.f32.mrf.mxu0
  %v1210 = vadd.f32 %v951, %v1209
  %1211 = vmatmul.bf16.gmra.mxu0 %v739
  %v1212 = vpop.f32.mrf.mxu0
  %v1213 = vadd.f32 %v954, %v1212
  %v1214 = vpop.f32.mrf.mxu0
  %v1215 = vadd.f32 %v956, %v1214
  %1216 = vmatmul.bf16.gmra.mxu0 %v742
  %v1217 = vpop.f32.mrf.mxu0
  %v1218 = vadd.f32 %v959, %v1217
  %v1219 = vpop.f32.mrf.mxu0
  %v1220 = vadd.f32 %v961, %v1219
  %1221 = vmatmul.bf16.gmra.mxu0 %v745
  %v1222 = vpop.f32.mrf.mxu0
  %v1223 = vadd.f32 %v964, %v1222
  %v1224 = vpop.f32.mrf.mxu0
  %v1225 = vadd.f32 %v966, %v1224
  %1226 = vmatmul.bf16.gmra.mxu0 %v748
  %v1227 = vpop.f32.mrf.mxu0
  %v1228 = vadd.f32 %v969, %v1227
  %v1229 = vpop.f32.mrf.mxu0
  %v1230 = vadd.f32 %v971, %v1229
  %1231 = vmatmul.bf16.gmra.mxu0 %v751
  %v1232 = vpop.f32.mrf.mxu0
  %v1233 = vadd.f32 %v974, %v1232
  %v1234 = vpop.f32.mrf.mxu0
  %v1235 = vadd.f32 %v976, %v1234
  %1236 = vmatmul.bf16.gmra.mxu0 %v754
  %v1237 = vpop.f32.mrf.mxu0
  %v1238 = vadd.f32 %v979, %v1237
  %v1239 = vpop.f32.mrf.mxu0
  %v1240 = vadd.f32 %v981, %v1239
  %1241 = vmatmul.bf16.gmra.mxu0 %v757
  %v1242 = vpop.f32.mrf.mxu0
  %v1243 = vadd.f32 %v984, %v1242
  %v1244 = vpop.f32.mrf.mxu0
  %v1245 = vadd.f32 %v986, %v1244
  %1246 = vmatmul.bf16.gmra.mxu0 %v760
  %v1247 = vpop.f32.mrf.mxu0
  %v1248 = vadd.f32 %v989, %v1247
  %v1249 = vpop.f32.mrf.mxu0
  %v1250 = vadd.f32 %v991, %v1249
  %1251 = vmatmul.bf16.gmra.mxu0 %v763
  %v1252 = vpop.f32.mrf.mxu0
  %v1253 = vadd.f32 %v994, %v1252
  %v1254 = vpop.f32.mrf.mxu0
  %v1255 = vadd.f32 %v996, %v1254
  %1256 = vmatmul.bf16.gmra.mxu0 %v766
  %v1257 = vpop.f32.mrf.mxu0
  %v1258 = vadd.f32 %v999, %v1257
  %v1259 = vpop.f32.mrf.mxu0
  %v1260 = vadd.f32 %v1001, %v1259
  %1261 = vmatmul.bf16.gmra.mxu0 %v769
  %v1262 = vpop.f32.mrf.mxu0
  %v1263 = vadd.f32 %v1004, %v1262
  %v1264 = vpop.f32.mrf.mxu0
  %v1265 = vadd.f32 %v1006, %v1264
  %1266 = vmatmul.bf16.gmra.mxu0 %v772
  %v1267 = vpop.f32.mrf.mxu0
  %v1268 = vadd.f32 %v1009, %v1267
  %v1269 = vpop.f32.mrf.mxu0
  %v1270 = vadd.f32 %v1011, %v1269
  %1271 = vmatmul.bf16.gmra.mxu0 %v775
  %v1272 = vpop.f32.mrf.mxu0
  %v1273 = vadd.f32 %v1014, %v1272
  %v1274 = vpop.f32.mrf.mxu0
  %v1275 = vadd.f32 %v1016, %v1274
  %1276 = vmatmul.bf16.gmra.mxu0 %v778
  %v1277 = vpop.f32.mrf.mxu0
  %v1278 = vadd.f32 %v1019, %v1277
  %v1279 = vpop.f32.mrf.mxu0
  %v1280 = vadd.f32 %v1021, %v1279
  %1281 = vmatmul.bf16.gmra.mxu0 %v781
  %v1282 = vpop.f32.mrf.mxu0
  %v1283 = vadd.f32 %v1024, %v1282
  %v1284 = vpop.f32.mrf.mxu0
  %v1285 = vadd.f32 %v1026, %v1284
  %1286 = vmatmul.bf16.gmra.mxu0 %v784
  %v1287 = vpop.f32.mrf.mxu0
  %v1288 = vadd.f32 %v1029, %v1287
  %v1289 = vpop.f32.mrf.mxu0
  %v1290 = vadd.f32 %v1031, %v1289
  %1291 = vmatmul.bf16.gmra.mxu0 %v787
  %v1292 = vpop.f32.mrf.mxu0
  %v1293 = vadd.f32 %v1034, %v1292
  %v1294 = vpop.f32.mrf.mxu0
  %v1295 = vadd.f32 %v1036, %v1294
  %1296 = vmatmul.bf16.gmra.mxu0 %v790
  %v1297 = vpop.f32.mrf.mxu0
  %v1298 = vadd.f32 %v1039, %v1297
  %v1299 = vpop.f32.mrf.mxu0
  %v1300 = vadd.f32 %v1041, %v1299
  %1301 = vmatmul.bf16.gmra.mxu0 %v793
  %v1302 = vpop.f32.mrf.mxu0
  %v1303 = vadd.f32 %v1044, %v1302
  %v1304 = vpop.f32.mrf.mxu0
  %v1305 = vadd.f32 %v1046, %v1304
  %1306 = vmatmul.bf16.gmra.mxu0 %v796
  %v1307 = vpop.f32.mrf.mxu0
  %v1308 = vadd.f32 %v1049, %v1307
  %v1309 = vpop.f32.mrf.mxu0
  %v1310 = vadd.f32 %v1051, %v1309
  %1311 = vmatmul.bf16.gmra.mxu0 %v799
  %v1312 = vpop.f32.mrf.mxu0
  %v1313 = vadd.f32 %v1054, %v1312
  %v1314 = vpop.f32.mrf.mxu0
  %v1315 = vadd.f32 %v1056, %v1314
  %1316 = vmatmul.bf16.gmra.mxu0 %v802
  %v1317 = vpop.f32.mrf.mxu0
  %v1318 = vadd.f32 %v1059, %v1317
  %v1319 = vpop.f32.mrf.mxu0
  %v1320 = vadd.f32 %v1061, %v1319
  %1321 = vmatmul.bf16.gmra.mxu0 %v805
  %v1322 = vpop.f32.mrf.mxu0
  %v1323 = vadd.f32 %v1064, %v1322
  %v1324 = vpop.f32.mrf.mxu0
  %v1325 = vadd.f32 %v1066, %v1324
  %1326 = vmatmul.bf16.gmra.mxu0 %v808
  %v1327 = vpop.f32.mrf.mxu0
  %v1328 = vadd.f32 %v1069, %v1327
  %v1329 = vpop.f32.mrf.mxu0
  %v1330 = vadd.f32 %v1071, %v1329
  %1331 = vdwg.mxu0
  %v1332 = vmax.f32 %v1083, %v1145
  %v1333 = vmax.f32 %v1085, %v1148
  %v1334 = vmax.f32 %v1088, %v1150
  %v1335 = vmax.f32 %v1090, %v1153
  %v1336 = vmax.f32 %v1093, %v1155
  %v1337 = vmax.f32 %v1095, %v1158
  %v1338 = vmax.f32 %v1098, %v1160
  %v1339 = vmax.f32 %v1100, %v1163
  %v1340 = vmax.f32 %v1103, %v1165
  %v1341 = vmax.f32 %v1105, %v1168
  %v1342 = vmax.f32 %v1108, %v1170
  %v1343 = vmax.f32 %v1110, %v1173
  %v1344 = vmax.f32 %v1113, %v1175
  %v1345 = vmax.f32 %v1115, %v1178
  %v1346 = vmax.f32 %v1118, %v1180
  %v1347 = vmax.f32 %v1120, %v1183
  %v1348 = vmax.f32 %v1123, %v1185
  %v1349 = vmax.f32 %v1125, %v1188
  %v1350 = vmax.f32 %v1128, %v1190
  %v1351 = vmax.f32 %v1130, %v1193
  %v1352 = vmax.f32 %v1133, %v1195
  %v1353 = vmax.f32 %v1135, %v1198
  %v1354 = vmax.f32 %v1138, %v1200
  %v1355 = vmax.f32 %v1140, %v1203
  %v1356 = vmax.f32 %v1143, %v1205
  %v1357 = vmax.f32 %v1208, %v1270
  %v1358 = vmax.f32 %v1210, %v1273
  %v1359 = vmax.f32 %v1213, %v1275
  %v1360 = vmax.f32 %v1215, %v1278
  %v1361 = vmax.f32 %v1218, %v1280
  %v1362 = vmax.f32 %v1220, %v1283
  %v1363 = vmax.f32 %v1223, %v1285
  %v1364 = vmax.f32 %v1225, %v1288
  %v1365 = vmax.f32 %v1228, %v1290
  %v1366 = vmax.f32 %v1230, %v1293
  %v1367 = vmax.f32 %v1233, %v1295
  %v1368 = vmax.f32 %v1235, %v1298
  %v1369 = vmax.f32 %v1238, %v1300
  %v1370 = vmax.f32 %v1240, %v1303
  %v1371 = vmax.f32 %v1243, %v1305
  %v1372 = vmax.f32 %v1245, %v1308
  %v1373 = vmax.f32 %v1248, %v1310
  %v1374 = vmax.f32 %v1250, %v1313
  %v1375 = vmax.f32 %v1253, %v1315
  %v1376 = vmax.f32 %v1255, %v1318
  %v1377 = vmax.f32 %v1258, %v1320
  %v1378 = vmax.f32 %v1260, %v1323
  %v1379 = vmax.f32 %v1263, %v1325
  %v1380 = vmax.f32 %v1265, %v1328
  %v1381 = vmax.f32 %v1268, %v1330
  %v1382 = vmax.f32 %v1332, %v1357
  %v1383 = vmax.f32 %v1333, %v1358
  %v1384 = vmax.f32 %v1334, %v1359
  %v1385 = vmax.f32 %v1335, %v1360
  %v1386 = vmax.f32 %v1336, %v1361
  %v1387 = vmax.f32 %v1337, %v1362
  %v1388 = vmax.f32 %v1338, %v1363
  %v1389 = vmax.f32 %v1339, %v1364
  %v1390 = vmax.f32 %v1340, %v1365
  %v1391 = vmax.f32 %v1341, %v1366
  %v1392 = vmax.f32 %v1342, %v1367
  %v1393 = vmax.f32 %v1343, %v1368
  %v1394 = vmax.f32 %v1344, %v1369
  %v1395 = vmax.f32 %v1345, %v1370
  %v1396 = vmax.f32 %v1346, %v1371
  %v1397 = vmax.f32 %v1347, %v1372
  %v1398 = vmax.f32 %v1348, %v1373
  %v1399 = vmax.f32 %v1349, %v1374
  %v1400 = vmax.f32 %v1350, %v1375
  %v1401 = vmax.f32 %v1351, %v1376
  %v1402 = vmax.f32 %v1352, %v1377
  %v1403 = vmax.f32 %v1353, %v1378
  %v1404 = vmax.f32 %v1354, %v1379
  %v1405 = vmax.f32 %v1355, %v1380
  %v1406 = vmax.f32 %v1356, %v1381
  %v1407 = vld [vmem:[%s2] sm:$0x1]
  %v1409 = vperm.slane %v1407, 0
  %v1411 = vadd.f32 %v1382, %v1409
  %v1412 = vadd.f32 %v1383, %v1409
  %v1413 = vadd.f32 %v1384, %v1409
  %v1414 = vadd.f32 %v1385, %v1409
  %v1415 = vadd.f32 %v1386, %v1409
  %v1416 = vadd.f32 %v1387, %v1409
  %v1417 = vadd.f32 %v1388, %v1409
  %v1418 = vadd.f32 %v1389, %v1409
  %v1419 = vadd.f32 %v1390, %v1409
  %v1420 = vadd.f32 %v1391, %v1409
  %v1421 = vadd.f32 %v1392, %v1409
  %v1422 = vadd.f32 %v1393, %v1409
  %v1423 = vadd.f32 %v1394, %v1409
  %v1424 = vadd.f32 %v1395, %v1409
  %v1425 = vadd.f32 %v1396, %v1409
  %v1426 = vadd.f32 %v1397, %v1409
  %v1427 = vadd.f32 %v1398, %v1409
  %v1428 = vadd.f32 %v1399, %v1409
  %v1429 = vadd.f32 %v1400, %v1409
  %v1430 = vadd.f32 %v1401, %v1409
  %v1431 = vadd.f32 %v1402, %v1409
  %v1432 = vadd.f32 %v1403, %v1409
  %v1433 = vadd.f32 %v1404, %v1409
  %v1434 = vadd.f32 %v1405, %v1409
  %v1435 = vadd.f32 %v1406, %v1409
  %v1436 = vmax.f32 %v1411, 0.0
  %v1437 = vmax.f32 %v1412, 0.0
  %v1438 = vmax.f32 %v1413, 0.0
  %v1439 = vmax.f32 %v1414, 0.0
  %v1440 = vmax.f32 %v1415, 0.0
  %v1441 = vmax.f32 %v1416, 0.0
  %v1442 = vmax.f32 %v1417, 0.0
  %v1443 = vmax.f32 %v1418, 0.0
  %v1444 = vmax.f32 %v1419, 0.0
  %v1445 = vmax.f32 %v1420, 0.0
  %v1446 = vmax.f32 %v1421, 0.0
  %v1447 = vmax.f32 %v1422, 0.0
  %v1448 = vmax.f32 %v1423, 0.0
  %v1449 = vmax.f32 %v1424, 0.0
  %v1450 = vmax.f32 %v1425, 0.0
  %v1451 = vmax.f32 %v1426, 0.0
  %v1452 = vmax.f32 %v1427, 0.0
  %v1453 = vmax.f32 %v1428, 0.0
  %v1454 = vmax.f32 %v1429, 0.0
  %v1455 = vmax.f32 %v1430, 0.0
  %v1456 = vmax.f32 %v1431, 0.0
  %v1457 = vmax.f32 %v1432, 0.0
  %v1458 = vmax.f32 %v1433, 0.0
  %v1459 = vmax.f32 %v1434, 0.0
  %v1460 = vmax.f32 %v1435, 0.0
  %vm1461 = vcmask 130048
  %1462 = vst.msk [vmem:[#allocation2] sm:$0xff] %vm1461, %v1436
  %1464 = vrot.lane.b32.xlu0 %v1437, 16
  %v1465 = vpop.permute.xlu0 %1464
  %vm1467 = vcmask 261248
  %1468 = vst.msk [vmem:[#allocation2] sm:$0xff] %vm1467, %v1465
  %1470 = vrot.lane.b32.xlu0 %v1438, 32
  %v1471 = vpop.permute.xlu0 %1470
  %vm1473 = vcmask 392448
  %1474 = vst.msk [vmem:[#allocation2] sm:$0xff] %vm1473, %v1471
  %1476 = vrot.lane.b32.xlu0 %v1439, 48
  %v1477 = vpop.permute.xlu0 %1476
  %vm1479 = vcmask 523648
  %1480 = vst.msk [vmem:[#allocation2] sm:$0xff] %vm1479, %v1477
  %1482 = vrot.lane.b32.xlu0 %v1440, 64
  %v1483 = vpop.permute.xlu0 %1482
  %vm1485 = vcmask 654848
  %1486 = vst.msk [vmem:[#allocation2] sm:$0xff] %vm1485, %v1483
  %1488 = vrot.lane.b32.xlu0 %v1441, 80
  %v1489 = vpop.permute.xlu0 %1488
  %vm1491 = vcmask 786048
  %1492 = vst.msk [vmem:[#allocation2] sm:$0xff] %vm1491, %v1489
  %1494 = vrot.lane.b32.xlu0 %v1442, 96
  %v1495 = vpop.permute.xlu0 %1494
  %vm1497 = vcmask 917248
  %1498 = vst.msk [vmem:[#allocation2] sm:$0xff] %vm1497, %v1495
  %1500 = vrot.lane.b32.xlu0 %v1443, 112
  %v1501 = vpop.permute.xlu0 %1500
  %vm1503 = vcmask 1048448
  %1504 = vst.msk [vmem:[#allocation2] sm:$0xff] %vm1503, %v1501
  %1505 = vst.msk [vmem:[#allocation2 + $0x8] sm:$0xff] %vm1461, %v1444
  %1507 = vrot.lane.b32.xlu0 %v1445, 16
  %v1508 = vpop.permute.xlu0 %1507
  %1510 = vst.msk [vmem:[#allocation2 + $0x8] sm:$0xff] %vm1467, %v1508
  %1512 = vrot.lane.b32.xlu0 %v1446, 32
  %v1513 = vpop.permute.xlu0 %1512
  %1515 = vst.msk [vmem:[#allocation2 + $0x8] sm:$0xff] %vm1473, %v1513
  %1517 = vrot.lane.b32.xlu0 %v1447, 48
  %v1518 = vpop.permute.xlu0 %1517
  %1520 = vst.msk [vmem:[#allocation2 + $0x8] sm:$0xff] %vm1479, %v1518
  %1522 = vrot.lane.b32.xlu0 %v1448, 64
  %v1523 = vpop.permute.xlu0 %1522
  %1525 = vst.msk [vmem:[#allocation2 + $0x8] sm:$0xff] %vm1485, %v1523
  %1527 = vrot.lane.b32.xlu0 %v1449, 80
  %v1528 = vpop.permute.xlu0 %1527
  %1530 = vst.msk [vmem:[#allocation2 + $0x8] sm:$0xff] %vm1491, %v1528
  %1532 = vrot.lane.b32.xlu0 %v1450, 96
  %v1533 = vpop.permute.xlu0 %1532
  %1535 = vst.msk [vmem:[#allocation2 + $0x8] sm:$0xff] %vm1497, %v1533
  %1537 = vrot.lane.b32.xlu0 %v1451, 112
  %v1538 = vpop.permute.xlu0 %1537
  %1540 = vst.msk [vmem:[#allocation2 + $0x8] sm:$0xff] %vm1503, %v1538
  %1541 = vst.msk [vmem:[#allocation2 + $0x10] sm:$0xff] %vm1461, %v1452
  %1543 = vrot.lane.b32.xlu0 %v1453, 16
  %v1544 = vpop.permute.xlu0 %1543
  %1546 = vst.msk [vmem:[#allocation2 + $0x10] sm:$0xff] %vm1467, %v1544
  %1548 = vrot.lane.b32.xlu0 %v1454, 32
  %v1549 = vpop.permute.xlu0 %1548
  %1551 = vst.msk [vmem:[#allocation2 + $0x10] sm:$0xff] %vm1473, %v1549
  %1553 = vrot.lane.b32.xlu0 %v1455, 48
  %v1554 = vpop.permute.xlu0 %1553
  %1556 = vst.msk [vmem:[#allocation2 + $0x10] sm:$0xff] %vm1479, %v1554
  %1558 = vrot.lane.b32.xlu0 %v1456, 64
  %v1559 = vpop.permute.xlu0 %1558
  %1561 = vst.msk [vmem:[#allocation2 + $0x10] sm:$0xff] %vm1485, %v1559
  %1563 = vrot.lane.b32.xlu0 %v1457, 80
  %v1564 = vpop.permute.xlu0 %1563
  %1566 = vst.msk [vmem:[#allocation2 + $0x10] sm:$0xff] %vm1491, %v1564
  %1568 = vrot.lane.b32.xlu0 %v1458, 96
  %v1569 = vpop.permute.xlu0 %1568
  %1571 = vst.msk [vmem:[#allocation2 + $0x10] sm:$0xff] %vm1497, %v1569
  %1573 = vrot.lane.b32.xlu0 %v1459, 112
  %v1574 = vpop.permute.xlu0 %1573
  %1576 = vst.msk [vmem:[#allocation2 + $0x10] sm:$0xff] %vm1503, %v1574
  %1577 = vst.msk [vmem:[#allocation2 + $0x18] sm:$0xff] %vm1461, %v1460
  %v1578 = vld [vmem:[#allocation2] sm:$0xff]
  %v1579 = vld [vmem:[#allocation2 + $0x8] sm:$0xff]
  %v1580 = vld [vmem:[#allocation2 + $0x10] sm:$0xff]
  %v1581 = vld [vmem:[#allocation2 + $0x18] sm:$0xff]
  %v1582 = vld [vmem:[%s3] sm:$0xff]
  %v1583 = vld [vmem:[%s3 + $0x8] sm:$0xff]
  %v1584 = vld [vmem:[%s3 + $0x10] sm:$0xff]
  %v1585 = vld [vmem:[%s3 + $0x18] sm:$0xff]
  %v1586 = vld [vmem:[%s3 + $0x20] sm:$0xff]
  %v1587 = vld [vmem:[%s3 + $0x28] sm:$0xff]
  %v1588 = vld [vmem:[%s3 + $0x30] sm:$0xff]
  %v1589 = vld [vmem:[%s3 + $0x38] sm:$0xff]
  %v1590 = vld [vmem:[%s3 + $0x40] sm:$0xff]
  %v1591 = vld [vmem:[%s3 + $0x48] sm:$0xff]
  %v1592 = vld [vmem:[%s3 + $0x50] sm:$0xff]
  %v1593 = vld [vmem:[%s3 + $0x58] sm:$0xff]
  %v1594 = vld [vmem:[%s3 + $0x60] sm:$0xff]
  %v1595 = vld [vmem:[%s3 + $0x68] sm:$0xff]
  %v1596 = vld [vmem:[%s3 + $0x70] sm:$0xff]
  %v1597 = vld [vmem:[%s3 + $0x78] sm:$0xff]
  %v1598 = vld [vmem:[%s3 + $0x80] sm:$0xff]
  %v1599 = vld [vmem:[%s3 + $0x88] sm:$0xff]
  %v1600 = vld [vmem:[%s3 + $0x90] sm:$0xff]
  %v1601 = vld [vmem:[%s3 + $0x98] sm:$0xff]
  %v1602 = vld [vmem:[%s3 + $0xa0] sm:$0xff]
  %v1603 = vld [vmem:[%s3 + $0xa8] sm:$0xff]
  %v1604 = vld [vmem:[%s3 + $0xb0] sm:$0xff]
  %v1605 = vld [vmem:[%s3 + $0xb8] sm:$0xff]
  %v1606 = vld [vmem:[%s3 + $0xc0] sm:$0xff]
  %v1607 = vld [vmem:[%s3 + $0xc8] sm:$0xff]
  %v1608 = vld [vmem:[%s3 + $0xd0] sm:$0xff]
  %v1609 = vld [vmem:[%s3 + $0xd8] sm:$0xff]
  %v1610 = vld [vmem:[%s3 + $0xe0] sm:$0xff]
  %v1611 = vld [vmem:[%s3 + $0xe8] sm:$0xff]
  %v1612 = vld [vmem:[%s3 + $0xf0] sm:$0xff]
  %v1613 = vld [vmem:[%s3 + $0xf8] sm:$0xff]
  %v1614 = vld [vmem:[%s3 + $0x100] sm:$0xff]
  %v1615 = vld [vmem:[%s3 + $0x108] sm:$0xff]
  %v1616 = vld [vmem:[%s3 + $0x110] sm:$0xff]
  %v1617 = vld [vmem:[%s3 + $0x118] sm:$0xff]
  %v1618 = vld [vmem:[%s3 + $0x120] sm:$0xff]
  %v1619 = vld [vmem:[%s3 + $0x128] sm:$0xff]
  %v1620 = vld [vmem:[%s3 + $0x130] sm:$0xff]
  %v1621 = vld [vmem:[%s3 + $0x138] sm:$0xff]
  %v1622 = vld [vmem:[%s3 + $0x140] sm:$0xff]
  %v1623 = vld [vmem:[%s3 + $0x148] sm:$0xff]
  %v1624 = vld [vmem:[%s3 + $0x150] sm:$0xff]
  %v1625 = vld [vmem:[%s3 + $0x158] sm:$0xff]
  %v1626 = vld [vmem:[%s3 + $0x160] sm:$0xff]
  %v1627 = vld [vmem:[%s3 + $0x168] sm:$0xff]
  %v1628 = vld [vmem:[%s3 + $0x170] sm:$0xff]
  %v1629 = vld [vmem:[%s3 + $0x178] sm:$0xff]
  %v1630 = vld [vmem:[%s3 + $0x180] sm:$0xff]
  %v1631 = vld [vmem:[%s3 + $0x188] sm:$0xff]
  %v1632 = vld [vmem:[%s4] sm:$0x1]
  %v1634 = vperm.slane %v1632, 0
  %v1637 = vsel %vm1461, %v1581, 0
  %1639 = vmatpush.msra.mxu0 %v1597
  %1640 = vmatpush.msra.mxu0 %v1596
  %1641 = vmatpush.msra.mxu0 %v1595
  %1642 = vmatpush.msra.mxu0 %v1594
  %1643 = vmatpush.msra.mxu0 %v1593
  %1644 = vmatpush.msra.mxu0 %v1592
  %1645 = vmatpush.msra.mxu0 %v1591
  %1646 = vmatpush.msra.mxu0 %v1590
  %1647 = vmatpush.msra.mxu0 %v1589
  %1648 = vmatpush.msra.mxu0 %v1588
  %1649 = vmatpush.msra.mxu0 %v1587
  %1650 = vmatpush.msra.mxu0 %v1586
  %1651 = vmatpush.msra.mxu0 %v1585
  %1652 = vmatpush.msra.mxu0 %v1584
  %1653 = vmatpush.msra.mxu0 %v1583
  %1654 = vmatpush.msra.mxu0 %v1582
  %1655 = vmatmul.f32.gmra.mxu0 %v1578
  %v1656 = vpop.f32.mrf.mxu0
  %v1657 = vadd.f32 %v1634, %v1656
  %1658 = vdwg.mxu0
  %1659 = vmatpush.msra.mxu0 %v1613
  %1660 = vmatpush.msra.mxu0 %v1612
  %1661 = vmatpush.msra.mxu0 %v1611
  %1662 = vmatpush.msra.mxu0 %v1610
  %1663 = vmatpush.msra.mxu0 %v1609
  %1664 = vmatpush.msra.mxu0 %v1608
  %1665 = vmatpush.msra.mxu0 %v1607
  %1666 = vmatpush.msra.mxu0 %v1606
  %1667 = vmatpush.msra.mxu0 %v1605
  %1668 = vmatpush.msra.mxu0 %v1604
  %1669 = vmatpush.msra.mxu0 %v1603
  %1670 = vmatpush.msra.mxu0 %v1602
  %1671 = vmatpush.msra.mxu0 %v1601
  %1672 = vmatpush.msra.mxu0 %v1600
  %1673 = vmatpush.msra.mxu0 %v1599
  %1674 = vmatpush.msra.mxu0 %v1598
  %1675 = vmatmul.f32.gmra.mxu0 %v1579
  %v1676 = vpop.f32.mrf.mxu0
  %v1677 = vadd.f32 %v1657, %v1676
  %1678 = vdwg.mxu0
  %1679 = vmatpush.msra.mxu0 %v1629
  %1680 = vmatpush.msra.mxu0 %v1628
  %1681 = vmatpush.msra.mxu0 %v1627
  %1682 = vmatpush.msra.mxu0 %v1626
  %1683 = vmatpush.msra.mxu0 %v1625
  %1684 = vmatpush.msra.mxu0 %v1624
  %1685 = vmatpush.msra.mxu0 %v1623
  %1686 = vmatpush.msra.mxu0 %v1622
  %1687 = vmatpush.msra.mxu0 %v1621
  %1688 = vmatpush.msra.mxu0 %v1620
  %1689 = vmatpush.msra.mxu0 %v1619
  %1690 = vmatpush.msra.mxu0 %v1618
  %1691 = vmatpush.msra.mxu0 %v1617
  %1692 = vmatpush.msra.mxu0 %v1616
  %1693 = vmatpush.msra.mxu0 %v1615
  %1694 = vmatpush.msra.mxu0 %v1614
  %1695 = vmatmul.f32.gmra.mxu0 %v1580
  %v1696 = vpop.f32.mrf.mxu0
  %v1697 = vadd.f32 %v1677, %v1696
  %1698 = vdwg.mxu0
  %1699 = vmatpush.msra.mxu0 0.0
  %1700 = vmatpush.msra.mxu0 0.0
  %1701 = vmatpush.msra.mxu0 0.0
  %1702 = vmatpush.msra.mxu0 0.0
  %1703 = vmatpush.msra.mxu0 0.0
  %1704 = vmatpush.msra.mxu0 0.0
  %1705 = vmatpush.msra.mxu0 0.0
  %1706 = vmatpush.msra.mxu0 0.0
  %1707 = vmatpush.msra.mxu0 0.0
  %1708 = vmatpush.msra.mxu0 0.0
  %1709 = vmatpush.msra.mxu0 0.0
  %1710 = vmatpush.msra.mxu0 0.0
  %1711 = vmatpush.msra.mxu0 0.0
  %1712 = vmatpush.msra.mxu0 0.0
  %1713 = vmatpush.msra.mxu0 %v1631
  %1714 = vmatpush.msra.mxu0 %v1630
  %1715 = vmatmul.f32.gmra.mxu0 %v1637
  %v1716 = vpop.f32.mrf.mxu0
  %v1717 = vadd.f32 %v1697, %v1716
  %1718 = vdwg.mxu0
  %v1719 = vmax.f32 %v1717, 0.0
  %v1720 = vld [vmem:[%s5] sm:$0xff]
  %v1721 = vld [vmem:[%s5 + $0x8] sm:$0xff]
  %v1722 = vld [vmem:[%s5 + $0x10] sm:$0xff]
  %v1723 = vld [vmem:[%s5 + $0x18] sm:$0xff]
  %v1724 = vld [vmem:[%s5 + $0x20] sm:$0xff]
  %v1725 = vld [vmem:[%s5 + $0x28] sm:$0xff]
  %v1726 = vld [vmem:[%s5 + $0x30] sm:$0xff]
  %v1727 = vld [vmem:[%s5 + $0x38] sm:$0xff]
  %v1728 = vld [vmem:[%s5 + $0x40] sm:$0xff]
  %v1729 = vld [vmem:[%s5 + $0x48] sm:$0xff]
  %v1730 = vld [vmem:[%s5 + $0x50] sm:$0xff]
  %v1731 = vld [vmem:[%s5 + $0x58] sm:$0xff]
  %v1732 = vld [vmem:[%s5 + $0x60] sm:$0xff]
  %v1733 = vld [vmem:[%s5 + $0x68] sm:$0xff]
  %v1734 = vld [vmem:[%s5 + $0x70] sm:$0xff]
  %v1735 = vld [vmem:[%s6] sm:$0x1]
  %v1737 = vperm.slane %v1735, 0
  %vm1739 = vcmask 982016
  %v1741 = vsel %vm1739, %v1719, 0
  %1743 = vmatpush.msra.mxu0 0.0
  %1744 = vmatpush.msra.mxu0 %v1734
  %1745 = vmatpush.msra.mxu0 %v1733
  %1746 = vmatpush.msra.mxu0 %v1732
  %1747 = vmatpush.msra.mxu0 %v1731
  %1748 = vmatpush.msra.mxu0 %v1730
  %1749 = vmatpush.msra.mxu0 %v1729
  %1750 = vmatpush.msra.mxu0 %v1728
  %1751 = vmatpush.msra.mxu0 %v1727
  %1752 = vmatpush.msra.mxu0 %v1726
  %1753 = vmatpush.msra.mxu0 %v1725
  %1754 = vmatpush.msra.mxu0 %v1724
  %1755 = vmatpush.msra.mxu0 %v1723
  %1756 = vmatpush.msra.mxu0 %v1722
  %1757 = vmatpush.msra.mxu0 %v1721
  %1758 = vmatpush.msra.mxu0 %v1720
  %1759 = vmatmul.f32.gmra.mxu0 %v1741
  %v1760 = vpop.f32.mrf.mxu0
  %v1761 = vadd.f32 %v1737, %v1760
  %1762 = vdwg.mxu0
  %v1763 = vmax.f32 %v1761, 0.0
  %v1764 = vld [vmem:[%s7] sm:$0xff]
  %v1765 = vld [vmem:[%s7 + $0x8] sm:$0xff]
  %v1766 = vld [vmem:[%s7 + $0x10] sm:$0xff]
  %v1767 = vld [vmem:[%s7 + $0x18] sm:$0xff]
  %v1768 = vld [vmem:[%s7 + $0x20] sm:$0xff]
  %v1769 = vld [vmem:[%s7 + $0x28] sm:$0xff]
  %v1770 = vld [vmem:[%s7 + $0x30] sm:$0xff]
  %v1771 = vld [vmem:[%s7 + $0x38] sm:$0xff]
  %v1772 = vld [vmem:[%s7 + $0x40] sm:$0xff]
  %v1773 = vld [vmem:[%s7 + $0x48] sm:$0xff]
  %v1774 = vld [vmem:[%s7 + $0x50] sm:$0xf]
  %v1775 = vld [vmem:[%s8] sm:$0x1]
  %v1777 = vperm.slane %v1775, 0
  %vm1779 = vcmask 687104
  %v1781 = vsel %vm1779, %v1763, 0
  %vm1783 = vcmask 1043456
  %v1785 = vsel %vm1783, %v1774, 0
  %1787 = vmatpush.msra.mxu0 0.0
  %1788 = vmatpush.msra.mxu0 0.0
  %1789 = vmatpush.msra.mxu0 0.0
  %1790 = vmatpush.msra.mxu0 0.0
  %1791 = vmatpush.msra.mxu0 0.0
  %1792 = vmatpush.msra.mxu0 %v1785
  %1793 = vmatpush.msra.mxu0 %v1773
  %1794 = vmatpush.msra.mxu0 %v1772
  %1795 = vmatpush.msra.mxu0 %v1771
  %1796 = vmatpush.msra.mxu0 %v1770
  %1797 = vmatpush.msra.mxu0 %v1769
  %1798 = vmatpush.msra.mxu0 %v1768
  %1799 = vmatpush.msra.mxu0 %v1767
  %1800 = vmatpush.msra.mxu0 %v1766
  %1801 = vmatpush.msra.mxu0 %v1765
  %1802 = vmatpush.msra.mxu0 %v1764
  %1803 = vmatmul.f32.gmra.mxu0 %v1781
  %v1804 = vpop.f32.mrf.mxu0
  %v1805 = vadd.f32 %v1777, %v1804
  %1806 = vdwg.mxu0
  %vm1807 = vcmask 80896
  %1808 = vst.msk [vmem:[%s9] sm:$0xff] %vm1807, %v1805
  // Predicated region
  $region38: #{net_forward.3} parent=0 // pred_check
    _
  $region39: #{net_forward.3} parent=0 // pred_check_branch
    %1810 = sbr.rel (0) target = $region41
  $region40: #{net_forward.3} parent=0 // pred_region
    _
  $region41: #{net_forward.3} parent=0 // pred_fallthru
    _
  // Predicated region
  $region42: #{net_forward.3} parent=0 // pred_check
    _
  $region43: #{net_forward.3} parent=0 // pred_check_branch
    %1812 = sbr.rel (0) target = $region45
  $region44: #{net_forward.3} parent=0 // pred_region
    _
  $region45: #{net_forward.3} parent=0 // pred_fallthru
    _

</llo_original>
